<compile_context>
chip_gen: v6e
topology: v6e:2x2x1
jax: 0.10.0
libtpu: 0.0.40
codegen_flags: <defaults>
</compile_context>

<pallas_src>
import jax
import jax.numpy as jnp
from jax import lax
from jax.experimental import pallas as pl
from jax.experimental.pallas import tpu as pltpu


def _round_up(x, m):
    return -(-x // m) * m


# --------------------------------------------------------------------------
# Fused kernel: four MXU matmuls + VPU ReLUs per (TB, L) batch tile.
# --------------------------------------------------------------------------
def fused_cnn_kernel(x_ref, w1_ref, b1_ref, w2_ref, b2_ref,
                     w3_ref, b3_ref, w4_ref, b4_ref, o_ref):
    x = x_ref[...]                                                   # (TB, L)

    # conv1 (+ReLU) as banded matmul: (TB, L) @ (L, 16L) -> (TB, 16L).
    # Operands cast to the stored weight dtype (f32 or bf16); accumulate f32.
    h1 = jnp.dot(x.astype(w1_ref.dtype), w1_ref[...],
                 preferred_element_type=jnp.float32)
    h1 = jnp.maximum(h1 + b1_ref[...], 0.0)

    # conv2 (+ReLU): (TB, 16L) @ (16L, 32L) -> (TB, 32L); result is already
    # the flattened activation in lane-dense (l*32 + c) order.
    h2 = jnp.dot(h1.astype(w2_ref.dtype), w2_ref[...],
                 preferred_element_type=jnp.float32)
    h2 = jnp.maximum(h2 + b2_ref[...], 0.0)

    # fc1 (+ReLU): (TB, 32L) @ (32L, 128) -> (TB, 128)   (kept f32)
    h3 = jnp.dot(h2, w3_ref[...], preferred_element_type=jnp.float32)
    h3 = jnp.maximum(h3 + b3_ref[...], 0.0)

    # fc2 into a 128-lane padded slab: (TB, 128) @ (128, Cpad) -> (TB, Cpad)
    o_ref[...] = jnp.dot(h3, w4_ref[...],
                         preferred_element_type=jnp.float32) + b4_ref[...]


# --------------------------------------------------------------------------
# Tiling / VMEM heuristics.
# --------------------------------------------------------------------------
def _choose_tb(B, L, Cpad, block_b):
    """Batch tile: >=2 grid steps for v7x megacore, VMEM-bounded, MXU-friendly."""
    if B < 16:
        return B                                     # single full-batch tile
    # At least 2 grid steps so the "parallel" axis can shard across 2 TCs.
    tb = min(block_b, _round_up(-(-B // 2), 8), _round_up(B, 8))
    # Keep per-tile activations (x, h1, h2, h3, out) under ~24 MiB.
    per_row = (L + 16 * L + 32 * L + 128 + Cpad) * 4
    tb = min(tb, max(8, ((24 << 20) // per_row) // 8 * 8))
    if tb >= 128:
        tb = tb // 128 * 128        # full 128-row MXU passes (esp. v5e)
    else:
        tb = _round_up(tb, 8)
    return max(8, tb)


def _vmem_limit_bytes(TB, L, Cpad, weight_bytes):
    """Footprint-derived scoped-VMEM limit, clamped to 3/4 of physical VMEM."""
    act = TB * (16 * L + 32 * L + 128) * 4           # h1/h2/h3 temporaries
    io = 2 * TB * (L + Cpad) * 4                     # double-buffered x / out
    need = weight_bytes + io + 2 * act + (8 << 20)   # + compiler headroom
    try:
        cap = pltpu.get_tpu_info().vmem_capacity_bytes
    except Exception:
        cap = 64 << 20                               # conservative (v7x per-TC)
    return int(min(max(need, 32 << 20), cap * 3 // 4))


def fused_forward(x, W1, B1, W2, B2, W3, B3, W4, B4, *, block_b=512):
    B, L = x.shape
    L16, L32 = W1.shape[1], W2.shape[1]
    H, Cpad = W3.shape[1], W4.shape[1]

    TB = _choose_tb(B, L, Cpad, block_b)
    grid = (pl.cdiv(B, TB),)

    weights = (W1, B1, W2, B2, W3, B3, W4, B4)
    wshapes = [(L, L16), (1, L16), (L16, L32), (1, L32),
               (L32, H), (1, H), (H, Cpad), (1, Cpad)]
    weight_bytes = sum(int(w.size) * w.dtype.itemsize for w in weights)

    cost = pl.CostEstimate(
        flops=2 * B * (L * L16 + L16 * L32 + L32 * H + H * Cpad),
        transcendentals=0,
        bytes_accessed=int(x.size * x.dtype.itemsize + weight_bytes
                           + B * Cpad * 4))

    const = lambda i: (0, 0)

    def run(single_buffer_weights):
        # Constant-index-map weights never change across the grid -> single
        # buffer them (halves weight VMEM; what makes moderate L fit on v7x).
        wkw = ({"pipeline_mode": pl.Buffered(1)} if single_buffer_weights
               else {})
        in_specs = [pl.BlockSpec((TB, L), lambda i: (i, 0))]          # x tile
        in_specs += [pl.BlockSpec(s, const, **wkw) for s in wshapes]  # weights
        return pl.pallas_call(
            fused_cnn_kernel,
            out_shape=jax.ShapeDtypeStruct((B, Cpad), jnp.float32),
            grid=grid,
            in_specs=in_specs,
            out_specs=pl.BlockSpec((TB, Cpad), lambda i: (i, 0)),
            compiler_params=pltpu.CompilerParams(
                dimension_semantics=("parallel",),
                vmem_limit_bytes=_vmem_limit_bytes(TB, L, Cpad, weight_bytes),
            ),
            cost_estimate=cost,
        )(x, *weights)

    try:
        return run(True)
    except Exception:
        # TODO(synk): pipeline_mode=pl.Buffered(1) unsupported on this jax
        # build; fall back to default double-buffered weight blocks.
        return run(False)


# --------------------------------------------------------------------------
# One-time host-side parameter preparation (pure glue, no per-forward work).
# --------------------------------------------------------------------------
def prepare_params(p, input_dim, num_classes, *, conv_dtype=jnp.float32):
    L, C1, C2, H = input_dim, 16, 32, 128
    Cpad = _round_up(num_classes, 128)

    # band structure shared by both convs: k[lin, lout] = lin - lout + 1 (tap)
    k = jnp.arange(L)[:, None] - jnp.arange(L)[None, :] + 1
    valid = (k >= 0) & (k <= 2)
    kc = jnp.clip(k, 0, 2)

    # conv1 -> W1[lin, lout*16 + c] = conv1_w[c, 0, lin-lout+1] on the band
    w1_tap = jnp.transpose(p["conv1_w"][:, 0, :])                    # (3, 16)
    W1 = jnp.where(valid[:, :, None], w1_tap[kc], 0.0).reshape(L, L * C1)
    B1 = jnp.tile(p["conv1_b"], L).reshape(1, L * C1)

    # conv2 -> W2[lin*16+cin, lout*32+cout] = conv2_w[cout, cin, lin-lout+1]
    # TODO(synk): for input_dim >= ~64 replace this O(L^2) dense banded W2
    # with a band-tiled grid axis (O(L*TL) weight traffic + fc1 accumulator).
    w2_tap = jnp.transpose(p["conv2_w"], (2, 1, 0))                  # (3,16,32)
    w2band = jnp.where(valid[:, :, None, None], w2_tap[kc], 0.0)     # (L,L,16,32)
    W2 = jnp.transpose(w2band, (0, 2, 1, 3)).reshape(L * C1, L * C2)
    B2 = jnp.tile(p["conv2_b"], L).reshape(1, L * C2)

    # fc1 permuted so kernel flatten order (l*32+c) matches PyTorch (c*L+l)
    W3 = jnp.transpose(p["fc1_w"].reshape(H, C2, L), (2, 1, 0)).reshape(L * C2, H)
    B3 = p["fc1_b"].reshape(1, H)

    # fc2 padded to a lane-dense 128-wide output slab
    W4 = jnp.zeros((H, Cpad), jnp.float32).at[:, :num_classes].set(p["fc2_w"].T)
    B4 = jnp.zeros((1, Cpad), jnp.float32).at[:, :num_classes].set(p["fc2_b"][None, :])

    return {"W1": W1.astype(conv_dtype), "B1": B1,
            "W2": W2.astype(conv_dtype), "B2": B2,
            "W3": W3, "B3": B3, "W4": W4, "B4": B4}


def cnn_forward(x, prep, num_classes, *, block_b=512):
    out_pad = fused_forward(x, prep["W1"], prep["B1"], prep["W2"], prep["B2"],
                            prep["W3"], prep["B3"], prep["W4"], prep["B4"],
                            block_b=block_b)
    return out_pad[:, :num_classes]


# --------------------------------------------------------------------------
# Parameter init + pure-JAX reference (matches the PyTorch module exactly).
# --------------------------------------------------------------------------
def init_params(key, input_dim, num_classes):
    ks = jax.random.split(key, 8)
    s = 0.1
    return {
        "conv1_w": jax.random.normal(ks[0], (16, 1, 3), jnp.float32) * s,
        "conv1_b": jax.random.normal(ks[1], (16,), jnp.float32) * s,
        "conv2_w": jax.random.normal(ks[2], (32, 16, 3), jnp.float32) * s,
        "conv2_b": jax.random.normal(ks[3], (32,), jnp.float32) * s,
        "fc1_w": jax.random.normal(ks[4], (128, input_dim * 32), jnp.float32) * s,
        "fc1_b": jax.random.normal(ks[5], (128,), jnp.float32) * s,
        "fc2_w": jax.random.normal(ks[6], (num_classes, 128), jnp.float32) * s,
        "fc2_b": jax.random.normal(ks[7], (num_classes,), jnp.float32) * s,
    }


def reference_forward(x, p):
    xr = x[:, None, :]                                               # (B,1,L) NCW
    h = lax.conv_general_dilated(xr, p["conv1_w"], (1,), [(1, 1)],
                                 dimension_numbers=("NCH", "OIH", "NCH"))
    h = jnp.maximum(h + p["conv1_b"][None, :, None], 0.0)
    h = lax.conv_general_dilated(h, p["conv2_w"], (1,), [(1, 1)],
                                 dimension_numbers=("NCH", "OIH", "NCH"))
    h = jnp.maximum(h + p["conv2_b"][None, :, None], 0.0)
    flat = h.reshape(x.shape[0], -1)
    h = jnp.maximum(flat @ p["fc1_w"].T + p["fc1_b"], 0.0)
    return h @ p["fc2_w"].T + p["fc2_b"]


if __name__ == "__main__":
    input_dim, num_classes = 16, 4
    key = jax.random.PRNGKey(0)
    kx, kp = jax.random.split(key)
    params = init_params(kp, input_dim, num_classes)

    # f32 path, tiny batch (single full-batch tile), strict 1e-4 check.
    x_small = jax.random.normal(kx, (2, input_dim), jnp.float32)
    prep32 = prepare_params(params, input_dim, num_classes)
    out = jax.block_until_ready(cnn_forward(x_small, prep32, num_classes))
    ref = reference_forward(x_small, params)
    assert out.shape == (2, num_classes)
    assert jnp.allclose(out, ref, atol=1e-4, rtol=1e-4)

    # f32 path, batch=32 -> TB=16, grid=(2,): exercises the multi-tile
    # (v7x megacore-splittable) path.
    x_big = jax.random.normal(jax.random.PRNGKey(1), (32, input_dim), jnp.float32)
    out_b = jax.block_until_ready(cnn_forward(x_big, prep32, num_classes))
    ref_b = reference_forward(x_big, params)
    assert out_b.shape == (32, num_classes)
    assert jnp.allclose(out_b, ref_b, atol=1e-4, rtol=1e-4)

    # bf16 conv-operand path (higher MXU throughput, half the conv-weight
    # VMEM/DMA); validated at a tolerance appropriate for bf16 operands.
    prep16 = prepare_params(params, input_dim, num_classes,
                            conv_dtype=jnp.bfloat16)
    out_h = jax.block_until_ready(cnn_forward(x_big, prep16, num_classes))
    assert jnp.allclose(out_h, ref_b, atol=3e-2, rtol=3e-2)

    print("KERNEL_OK")
</pallas_src>

<mosaic_0001>
module attributes {stable_mosaic.version = 11 : i64} {
  func.func @fused_cnn_kernel(%arg0: i32, %arg1: memref<2x16xf32, #tpu.memory_space<vmem>>, %arg2: memref<16x256xf32, #tpu.memory_space<vmem>>, %arg3: memref<1x256xf32, #tpu.memory_space<vmem>>, %arg4: memref<256x512xf32, #tpu.memory_space<vmem>>, %arg5: memref<1x512xf32, #tpu.memory_space<vmem>>, %arg6: memref<512x128xf32, #tpu.memory_space<vmem>>, %arg7: memref<1x128xf32, #tpu.memory_space<vmem>>, %arg8: memref<128x128xf32, #tpu.memory_space<vmem>>, %arg9: memref<1x128xf32, #tpu.memory_space<vmem>>, %arg10: memref<2x128xf32, #tpu.memory_space<vmem>>) attributes {dimension_semantics = [#tpu.dimension_semantics<parallel>], iteration_bounds = array<i64: 1>, scalar_prefetch = 0 : i64, scratch_operands = 0 : i64, tpu.core_type = #tpu.core_type<tc>, window_params = [{transform_indices = @transform_0, window_bounds = array<i64: 2, 16>}, {pipeline_mode = #tpu.pipeline_mode<synchronous>, transform_indices = @transform_1, window_bounds = array<i64: 16, 256>}, {pipeline_mode = #tpu.pipeline_mode<synchronous>, transform_indices = @transform_2, window_bounds = array<i64: 1, 256>}, {pipeline_mode = #tpu.pipeline_mode<synchronous>, transform_indices = @transform_3, window_bounds = array<i64: 256, 512>}, {pipeline_mode = #tpu.pipeline_mode<synchronous>, transform_indices = @transform_4, window_bounds = array<i64: 1, 512>}, {pipeline_mode = #tpu.pipeline_mode<synchronous>, transform_indices = @transform_5, window_bounds = array<i64: 512, 128>}, {pipeline_mode = #tpu.pipeline_mode<synchronous>, transform_indices = @transform_6, window_bounds = array<i64: 1, 128>}, {pipeline_mode = #tpu.pipeline_mode<synchronous>, transform_indices = @transform_7, window_bounds = array<i64: 128, 128>}, {pipeline_mode = #tpu.pipeline_mode<synchronous>, transform_indices = @transform_8, window_bounds = array<i64: 1, 128>}, {transform_indices = @transform_9, window_bounds = array<i64: 2, 128>}]} {
    %c0 = arith.constant 0 : index
    %c0_0 = arith.constant 0 : index
    %0 = vector.load %arg1[%c0, %c0_0] : memref<2x16xf32, #tpu.memory_space<vmem>>, vector<2x16xf32>
    %c0_1 = arith.constant 0 : index
    %c0_2 = arith.constant 0 : index
    %1 = vector.load %arg2[%c0_1, %c0_2] : memref<16x256xf32, #tpu.memory_space<vmem>>, vector<16x256xf32>
    %cst = arith.constant dense<0.000000e+00> : vector<2x256xf32>
    %2 = tpu.matmul %0, %1, %cst {dimension_numbers = #tpu.dot_dimension_numbers<[1], [0], [0], [1], [0, 0, 1, 1], [], []>} : vector<2x16xf32>, vector<16x256xf32>, vector<2x256xf32> -> vector<2x256xf32>
    %c0_3 = arith.constant 0 : index
    %c0_4 = arith.constant 0 : index
    %3 = vector.load %arg3[%c0_3, %c0_4] : memref<1x256xf32, #tpu.memory_space<vmem>>, vector<1x256xf32>
    %4 = vector.broadcast %3 : vector<1x256xf32> to vector<2x256xf32>
    %5 = arith.addf %2, %4 : vector<2x256xf32>
    %cst_5 = arith.constant 0.000000e+00 : f32
    %6 = vector.broadcast %cst_5 : f32 to vector<2x256xf32>
    %7 = arith.maximumf %5, %6 : vector<2x256xf32>
    %c0_6 = arith.constant 0 : index
    %c0_7 = arith.constant 0 : index
    %8 = vector.load %arg4[%c0_6, %c0_7] : memref<256x512xf32, #tpu.memory_space<vmem>>, vector<256x512xf32>
    %cst_8 = arith.constant dense<0.000000e+00> : vector<2x512xf32>
    %9 = tpu.matmul %7, %8, %cst_8 {dimension_numbers = #tpu.dot_dimension_numbers<[1], [0], [0], [1], [0, 0, 1, 1], [], []>} : vector<2x256xf32>, vector<256x512xf32>, vector<2x512xf32> -> vector<2x512xf32>
    %c0_9 = arith.constant 0 : index
    %c0_10 = arith.constant 0 : index
    %10 = vector.load %arg5[%c0_9, %c0_10] : memref<1x512xf32, #tpu.memory_space<vmem>>, vector<1x512xf32>
    %11 = vector.broadcast %10 : vector<1x512xf32> to vector<2x512xf32>
    %12 = arith.addf %9, %11 : vector<2x512xf32>
    %cst_11 = arith.constant 0.000000e+00 : f32
    %13 = vector.broadcast %cst_11 : f32 to vector<2x512xf32>
    %14 = arith.maximumf %12, %13 : vector<2x512xf32>
    %c0_12 = arith.constant 0 : index
    %c0_13 = arith.constant 0 : index
    %15 = vector.load %arg6[%c0_12, %c0_13] : memref<512x128xf32, #tpu.memory_space<vmem>>, vector<512x128xf32>
    %cst_14 = arith.constant dense<0.000000e+00> : vector<2x128xf32>
    %16 = tpu.matmul %14, %15, %cst_14 {dimension_numbers = #tpu.dot_dimension_numbers<[1], [0], [0], [1], [0, 0, 1, 1], [], []>} : vector<2x512xf32>, vector<512x128xf32>, vector<2x128xf32> -> vector<2x128xf32>
    %c0_15 = arith.constant 0 : index
    %c0_16 = arith.constant 0 : index
    %17 = vector.load %arg7[%c0_15, %c0_16] : memref<1x128xf32, #tpu.memory_space<vmem>>, vector<1x128xf32>
    %18 = vector.broadcast %17 : vector<1x128xf32> to vector<2x128xf32>
    %19 = arith.addf %16, %18 : vector<2x128xf32>
    %cst_17 = arith.constant 0.000000e+00 : f32
    %20 = vector.broadcast %cst_17 : f32 to vector<2x128xf32>
    %21 = arith.maximumf %19, %20 : vector<2x128xf32>
    %c0_18 = arith.constant 0 : index
    %c0_19 = arith.constant 0 : index
    %22 = vector.load %arg8[%c0_18, %c0_19] : memref<128x128xf32, #tpu.memory_space<vmem>>, vector<128x128xf32>
    %cst_20 = arith.constant dense<0.000000e+00> : vector<2x128xf32>
    %23 = tpu.matmul %21, %22, %cst_20 {dimension_numbers = #tpu.dot_dimension_numbers<[1], [0], [0], [1], [0, 0, 1, 1], [], []>} : vector<2x128xf32>, vector<128x128xf32>, vector<2x128xf32> -> vector<2x128xf32>
    %c0_21 = arith.constant 0 : index
    %c0_22 = arith.constant 0 : index
    %24 = vector.load %arg9[%c0_21, %c0_22] : memref<1x128xf32, #tpu.memory_space<vmem>>, vector<1x128xf32>
    %25 = vector.broadcast %24 : vector<1x128xf32> to vector<2x128xf32>
    %26 = arith.addf %23, %25 : vector<2x128xf32>
    %c0_23 = arith.constant 0 : index
    %c0_24 = arith.constant 0 : index
    %27 = vector.load %arg10[%c0_23, %c0_24] : memref<2x128xf32, #tpu.memory_space<vmem>>, vector<2x128xf32>
    tpu.vector_store %arg10[%c0_23, %c0_24], %26 {strides = array<i32>} : memref<2x128xf32, #tpu.memory_space<vmem>>, vector<2x128xf32>,
    return
  }
  func.func @transform_0(%arg0: i32) -> (i32, i32) {
    %c0_i32 = arith.constant 0 : i32
    %c0_i32_0 = arith.constant 0 : i32
    return %arg0, %c0_i32 : i32, i32
  }
  func.func @transform_1(%arg0: i32) -> (i32, i32) {
    %c0_i32 = arith.constant 0 : i32
    %c0_i32_0 = arith.constant 0 : i32
    %c0_i32_1 = arith.constant 0 : i32
    return %c0_i32, %c0_i32_0 : i32, i32
  }
  func.func @transform_2(%arg0: i32) -> (i32, i32) {
    %c0_i32 = arith.constant 0 : i32
    %c0_i32_0 = arith.constant 0 : i32
    %c0_i32_1 = arith.constant 0 : i32
    return %c0_i32, %c0_i32_0 : i32, i32
  }
  func.func @transform_3(%arg0: i32) -> (i32, i32) {
    %c0_i32 = arith.constant 0 : i32
    %c0_i32_0 = arith.constant 0 : i32
    %c0_i32_1 = arith.constant 0 : i32
    return %c0_i32, %c0_i32_0 : i32, i32
  }
  func.func @transform_4(%arg0: i32) -> (i32, i32) {
    %c0_i32 = arith.constant 0 : i32
    %c0_i32_0 = arith.constant 0 : i32
    %c0_i32_1 = arith.constant 0 : i32
    return %c0_i32, %c0_i32_0 : i32, i32
  }
  func.func @transform_5(%arg0: i32) -> (i32, i32) {
    %c0_i32 = arith.constant 0 : i32
    %c0_i32_0 = arith.constant 0 : i32
    %c0_i32_1 = arith.constant 0 : i32
    return %c0_i32, %c0_i32_0 : i32, i32
  }
  func.func @transform_6(%arg0: i32) -> (i32, i32) {
    %c0_i32 = arith.constant 0 : i32
    %c0_i32_0 = arith.constant 0 : i32
    %c0_i32_1 = arith.constant 0 : i32
    return %c0_i32, %c0_i32_0 : i32, i32
  }
  func.func @transform_7(%arg0: i32) -> (i32, i32) {
    %c0_i32 = arith.constant 0 : i32
    %c0_i32_0 = arith.constant 0 : i32
    %c0_i32_1 = arith.constant 0 : i32
    return %c0_i32, %c0_i32_0 : i32, i32
  }
  func.func @transform_8(%arg0: i32) -> (i32, i32) {
    %c0_i32 = arith.constant 0 : i32
    %c0_i32_0 = arith.constant 0 : i32
    %c0_i32_1 = arith.constant 0 : i32
    return %c0_i32, %c0_i32_0 : i32, i32
  }
  func.func @transform_9(%arg0: i32) -> (i32, i32) {
    %c0_i32 = arith.constant 0 : i32
    %c0_i32_0 = arith.constant 0 : i32
    return %arg0, %c0_i32 : i32, i32
  }
}

module attributes {stable_mosaic.version = 11 : i64} {
  func.func @fused_cnn_kernel(%arg0: i32, %arg1: memref<2x16xf32, #tpu.memory_space<vmem>>, %arg2: memref<16x256xf32, #tpu.memory_space<vmem>>, %arg3: memref<1x256xf32, #tpu.memory_space<vmem>>, %arg4: memref<256x512xf32, #tpu.memory_space<vmem>>, %arg5: memref<1x512xf32, #tpu.memory_space<vmem>>, %arg6: memref<512x128xf32, #tpu.memory_space<vmem>>, %arg7: memref<1x128xf32, #tpu.memory_space<vmem>>, %arg8: memref<128x128xf32, #tpu.memory_space<vmem>>, %arg9: memref<1x128xf32, #tpu.memory_space<vmem>>, %arg10: memref<2x128xf32, #tpu.memory_space<vmem>>) attributes {dimension_semantics = [#tpu.dimension_semantics<parallel>], iteration_bounds = array<i64: 1>, scalar_prefetch = 0 : i64, scratch_operands = 0 : i64, tpu.core_type = #tpu.core_type<tc>, window_params = [{transform_indices = @transform_0, window_bounds = array<i64: 2, 16>}, {pipeline_mode = #tpu.pipeline_mode<synchronous>, transform_indices = @transform_1, window_bounds = array<i64: 16, 256>}, {pipeline_mode = #tpu.pipeline_mode<synchronous>, transform_indices = @transform_2, window_bounds = array<i64: 1, 256>}, {pipeline_mode = #tpu.pipeline_mode<synchronous>, transform_indices = @transform_3, window_bounds = array<i64: 256, 512>}, {pipeline_mode = #tpu.pipeline_mode<synchronous>, transform_indices = @transform_4, window_bounds = array<i64: 1, 512>}, {pipeline_mode = #tpu.pipeline_mode<synchronous>, transform_indices = @transform_5, window_bounds = array<i64: 512, 128>}, {pipeline_mode = #tpu.pipeline_mode<synchronous>, transform_indices = @transform_6, window_bounds = array<i64: 1, 128>}, {pipeline_mode = #tpu.pipeline_mode<synchronous>, transform_indices = @transform_7, window_bounds = array<i64: 128, 128>}, {pipeline_mode = #tpu.pipeline_mode<synchronous>, transform_indices = @transform_8, window_bounds = array<i64: 1, 128>}, {transform_indices = @transform_9, window_bounds = array<i64: 2, 128>}]} {
    %c0 = arith.constant 0 : index
    %c0_0 = arith.constant 0 : index
    %0 = vector.load %arg1[%c0, %c0_0] : memref<2x16xf32, #tpu.memory_space<vmem>>, vector<2x16xf32>
    %c0_1 = arith.constant 0 : index
    %c0_2 = arith.constant 0 : index
    %1 = vector.load %arg2[%c0_1, %c0_2] : memref<16x256xf32, #tpu.memory_space<vmem>>, vector<16x256xf32>
    %cst = arith.constant dense<0.000000e+00> : vector<2x256xf32>
    %2 = tpu.matmul %0, %1, %cst {dimension_numbers = #tpu.dot_dimension_numbers<[1], [0], [0], [1], [0, 0, 1, 1], [], []>} : vector<2x16xf32>, vector<16x256xf32>, vector<2x256xf32> -> vector<2x256xf32>
    %c0_3 = arith.constant 0 : index
    %c0_4 = arith.constant 0 : index
    %3 = vector.load %arg3[%c0_3, %c0_4] : memref<1x256xf32, #tpu.memory_space<vmem>>, vector<1x256xf32>
    %4 = vector.broadcast %3 : vector<1x256xf32> to vector<2x256xf32>
    %5 = arith.addf %2, %4 : vector<2x256xf32>
    %cst_5 = arith.constant 0.000000e+00 : f32
    %6 = vector.broadcast %cst_5 : f32 to vector<2x256xf32>
    %7 = arith.maximumf %5, %6 : vector<2x256xf32>
    %c0_6 = arith.constant 0 : index
    %c0_7 = arith.constant 0 : index
    %8 = vector.load %arg4[%c0_6, %c0_7] : memref<256x512xf32, #tpu.memory_space<vmem>>, vector<256x512xf32>
    %cst_8 = arith.constant dense<0.000000e+00> : vector<2x512xf32>
    %9 = tpu.matmul %7, %8, %cst_8 {dimension_numbers = #tpu.dot_dimension_numbers<[1], [0], [0], [1], [0, 0, 1, 1], [], []>} : vector<2x256xf32>, vector<256x512xf32>, vector<2x512xf32> -> vector<2x512xf32>
    %c0_9 = arith.constant 0 : index
    %c0_10 = arith.constant 0 : index
    %10 = vector.load %arg5[%c0_9, %c0_10] : memref<1x512xf32, #tpu.memory_space<vmem>>, vector<1x512xf32>
    %11 = vector.broadcast %10 : vector<1x512xf32> to vector<2x512xf32>
    %12 = arith.addf %9, %11 : vector<2x512xf32>
    %cst_11 = arith.constant 0.000000e+00 : f32
    %13 = vector.broadcast %cst_11 : f32 to vector<2x512xf32>
    %14 = arith.maximumf %12, %13 : vector<2x512xf32>
    %c0_12 = arith.constant 0 : index
    %c0_13 = arith.constant 0 : index
    %15 = vector.load %arg6[%c0_12, %c0_13] : memref<512x128xf32, #tpu.memory_space<vmem>>, vector<512x128xf32>
    %cst_14 = arith.constant dense<0.000000e+00> : vector<2x128xf32>
    %16 = tpu.matmul %14, %15, %cst_14 {dimension_numbers = #tpu.dot_dimension_numbers<[1], [0], [0], [1], [0, 0, 1, 1], [], []>} : vector<2x512xf32>, vector<512x128xf32>, vector<2x128xf32> -> vector<2x128xf32>
    %c0_15 = arith.constant 0 : index
    %c0_16 = arith.constant 0 : index
    %17 = vector.load %arg7[%c0_15, %c0_16] : memref<1x128xf32, #tpu.memory_space<vmem>>, vector<1x128xf32>
    %18 = vector.broadcast %17 : vector<1x128xf32> to vector<2x128xf32>
    %19 = arith.addf %16, %18 : vector<2x128xf32>
    %cst_17 = arith.constant 0.000000e+00 : f32
    %20 = vector.broadcast %cst_17 : f32 to vector<2x128xf32>
    %21 = arith.maximumf %19, %20 : vector<2x128xf32>
    %c0_18 = arith.constant 0 : index
    %c0_19 = arith.constant 0 : index
    %22 = vector.load %arg8[%c0_18, %c0_19] : memref<128x128xf32, #tpu.memory_space<vmem>>, vector<128x128xf32>
    %cst_20 = arith.constant dense<0.000000e+00> : vector<2x128xf32>
    %23 = tpu.matmul %21, %22, %cst_20 {dimension_numbers = #tpu.dot_dimension_numbers<[1], [0], [0], [1], [0, 0, 1, 1], [], []>} : vector<2x128xf32>, vector<128x128xf32>, vector<2x128xf32> -> vector<2x128xf32>
    %c0_21 = arith.constant 0 : index
    %c0_22 = arith.constant 0 : index
    %24 = vector.load %arg9[%c0_21, %c0_22] : memref<1x128xf32, #tpu.memory_space<vmem>>, vector<1x128xf32>
    %25 = vector.broadcast %24 : vector<1x128xf32> to vector<2x128xf32>
    %26 = arith.addf %23, %25 : vector<2x128xf32>
    %c0_23 = arith.constant 0 : index
    %c0_24 = arith.constant 0 : index
    %27 = vector.load %arg10[%c0_23, %c0_24] : memref<2x128xf32, #tpu.memory_space<vmem>>, vector<2x128xf32>
    tpu.vector_store %arg10[%c0_23, %c0_24], %26 {strides = array<i32>} : memref<2x128xf32, #tpu.memory_space<vmem>>, vector<2x128xf32>,
    return
  }
  func.func @transform_0(%arg0: i32) -> (i32, i32) {
    %c0_i32 = arith.constant 0 : i32
    %c0_i32_0 = arith.constant 0 : i32
    return %arg0, %c0_i32 : i32, i32
  }
  func.func @transform_1(%arg0: i32) -> (i32, i32) {
    %c0_i32 = arith.constant 0 : i32
    %c0_i32_0 = arith.constant 0 : i32
    %c0_i32_1 = arith.constant 0 : i32
    return %c0_i32, %c0_i32_0 : i32, i32
  }
  func.func @transform_2(%arg0: i32) -> (i32, i32) {
    %c0_i32 = arith.constant 0 : i32
    %c0_i32_0 = arith.constant 0 : i32
    %c0_i32_1 = arith.constant 0 : i32
    return %c0_i32, %c0_i32_0 : i32, i32
  }
  func.func @transform_3(%arg0: i32) -> (i32, i32) {
    %c0_i32 = arith.constant 0 : i32
    %c0_i32_0 = arith.constant 0 : i32
    %c0_i32_1 = arith.constant 0 : i32
    return %c0_i32, %c0_i32_0 : i32, i32
  }
  func.func @transform_4(%arg0: i32) -> (i32, i32) {
    %c0_i32 = arith.constant 0 : i32
    %c0_i32_0 = arith.constant 0 : i32
    %c0_i32_1 = arith.constant 0 : i32
    return %c0_i32, %c0_i32_0 : i32, i32
  }
  func.func @transform_5(%arg0: i32) -> (i32, i32) {
    %c0_i32 = arith.constant 0 : i32
    %c0_i32_0 = arith.constant 0 : i32
    %c0_i32_1 = arith.constant 0 : i32
    return %c0_i32, %c0_i32_0 : i32, i32
  }
  func.func @transform_6(%arg0: i32) -> (i32, i32) {
    %c0_i32 = arith.constant 0 : i32
    %c0_i32_0 = arith.constant 0 : i32
    %c0_i32_1 = arith.constant 0 : i32
    return %c0_i32, %c0_i32_0 : i32, i32
  }
  func.func @transform_7(%arg0: i32) -> (i32, i32) {
    %c0_i32 = arith.constant 0 : i32
    %c0_i32_0 = arith.constant 0 : i32
    %c0_i32_1 = arith.constant 0 : i32
    return %c0_i32, %c0_i32_0 : i32, i32
  }
  func.func @transform_8(%arg0: i32) -> (i32, i32) {
    %c0_i32 = arith.constant 0 : i32
    %c0_i32_0 = arith.constant 0 : i32
    %c0_i32_1 = arith.constant 0 : i32
    return %c0_i32, %c0_i32_0 : i32, i32
  }
  func.func @transform_9(%arg0: i32) -> (i32, i32) {
    %c0_i32 = arith.constant 0 : i32
    %c0_i32_0 = arith.constant 0 : i32
    return %arg0, %c0_i32 : i32, i32
  }
}

</mosaic_0001>

<llo_original>
// kernel: tpu_custom_call.1
$region0: #{tpu_custom_call.1}
  #allocation0 [shape = 'u32[]', space=smem, size = 0x4, offset = 0x4, fixed_abs, tag = 'smem constant byte address 0x4 - core index']
  #allocation1 [shape = 'u32[144,128]{1,0:T(1,128)}', space=vmem, size = 0x12000, scoped, tag = 'internal scratch']
  %s0 = inlined_call_operand.hbm [shape: f32[2,16], index: 0, kind: input, shape index: {}]
  %s1 = inlined_call_operand.hbm [shape: f32[16,256], index: 1, kind: input, shape index: {}]
  %s2 = inlined_call_operand.vmem [shape: f32[1,256], index: 2, kind: input, shape index: {}]
  %s3 = inlined_call_operand.hbm [shape: f32[256,512], index: 3, kind: input, shape index: {}]
  %s4 = inlined_call_operand.vmem [shape: f32[1,512], index: 4, kind: input, shape index: {}]
  %s5 = inlined_call_operand.hbm [shape: f32[512,128], index: 5, kind: input, shape index: {}]
  %s6 = inlined_call_operand.vmem [shape: f32[1,128], index: 6, kind: input, shape index: {}]
  %s7 = inlined_call_operand.hbm [shape: f32[128,128], index: 7, kind: input, shape index: {}]
  %s8 = inlined_call_operand.vmem [shape: f32[1,128], index: 8, kind: input, shape index: {}]
  %s9 = inlined_call_operand.hbm [shape: f32[2,128], index: 9, kind: output, shape index: {}]
  %s10 = sld [smem:[#allocation0]]
  $region66: #{tpu_custom_call.1} parent=0
    _
  %s12 = ssub.s32 1, %s10
  %s13 = scalar_select 0, %s12, %s10
  $region1: #{tpu_custom_call.1} parent=0
    #allocation2 [shape = 'u8[1024]{0}', space=vmem, size = 0x400, scoped, tag = 'input window, operand 0, single buffered']
    #allocation3 [shape = 's32[1]{0}', space=sflag, size = 0x4, scoped, tag = 'scoped memory for tpu_custom_call.1']
    #allocation4 [shape = 's32[1]{0}', space=sflag, size = 0x4, scoped, tag = 'scoped memory for tpu_custom_call.1']
    #allocation5 [shape = 'u8[16384]{0}', space=vmem, size = 0x4000, scoped, tag = 'input window, operand 1, single buffered']
    #allocation6 [shape = 's32[1]{0}', space=sflag, size = 0x4, scoped, tag = 'scoped memory for tpu_custom_call.1']
    #allocation7 [shape = 'u8[524288]{0}', space=vmem, size = 0x80000, scoped, tag = 'input window, operand 3, single buffered']
    #allocation8 [shape = 'u8[262144]{0}', space=vmem, size = 0x40000, scoped, tag = 'input window, operand 5, single buffered']
    #allocation9 [shape = 's32[1]{0}', space=sflag, size = 0x4, scoped, tag = 'scoped memory for tpu_custom_call.1']
    #allocation10 [shape = 'u8[65536]{0}', space=vmem, size = 0x10000, scoped, tag = 'input window, operand 7, single buffered']
    #allocation11 [shape = 'u8[1024]{0}', space=vmem, size = 0x400, scoped, tag = 'output window, operand 0, single buffered']
    %14 = vsyncpa [#allocation3], 0
    %15 = vsyncpa [#allocation6], 0
    %16 = vsyncpa [#allocation9], 0
    %17 = vsyncpa [#allocation4], 0
    // Predicated region
    $region2: #{tpu_custom_call.1} parent=1 // pred_check
      _
    $region3: #{tpu_custom_call.1} parent=1 // pred_check_branch
      %19 = sbr.rel (0) target = $region5
    $region4: #{tpu_custom_call.1} parent=1 // pred_region
      %s21 = ssub.s32 32, 32
      %22 = vsyncadd [#allocation3], %s21
      %s24 = sshll.u32 [#allocation2], 4
      %s25 = int_to_ptr.vmem [resolvable:$true] %s24
      %27 = dma.hbm_to_vmem [thread:$0]  %s0, 32, %s25, [#allocation3]
    $region5: #{tpu_custom_call.1} parent=1 // pred_fallthru
      _
    // Predicated region
    $region6: #{tpu_custom_call.1} parent=1 // pred_check
      _
    $region7: #{tpu_custom_call.1} parent=1 // pred_check_branch
      %29 = sbr.rel (0) target = $region9
    $region8: #{tpu_custom_call.1} parent=1 // pred_region
      %s31 = ssub.s32 512, 512
      %32 = vsyncadd [#allocation6], %s31
      %s33 = sshll.u32 [#allocation5], 4
      %s34 = int_to_ptr.vmem [resolvable:$true] %s33
      %39 = dma.hbm_to_vmem [thread:$0]  %s1, 512, %s34, [#allocation6], 256, 256, 16
    $region9: #{tpu_custom_call.1} parent=1 // pred_fallthru
      _
    // Predicated region
    $region10: #{tpu_custom_call.1} parent=1 // pred_check
      _
    $region11: #{tpu_custom_call.1} parent=1 // pred_check_branch
      %41 = sbr.rel (0) target = $region13
    $region12: #{tpu_custom_call.1} parent=1 // pred_region
      _
    $region13: #{tpu_custom_call.1} parent=1 // pred_fallthru
      _
    // Predicated region
    $region14: #{tpu_custom_call.1} parent=1 // pred_check
      _
    $region15: #{tpu_custom_call.1} parent=1 // pred_check_branch
      %43 = sbr.rel (0) target = $region17
    $region16: #{tpu_custom_call.1} parent=1 // pred_region
      %s45 = ssub.s32 16384, 16384
      %46 = vsyncadd [#allocation6], %s45
      %s47 = sshll.u32 [#allocation7], 4
      %s48 = int_to_ptr.vmem [resolvable:$true] %s47
      %53 = dma.hbm_to_vmem [thread:$0]  %s3, 16384, %s48, [#allocation6], 512, 512, 32
    $region17: #{tpu_custom_call.1} parent=1 // pred_fallthru
      _
    // Predicated region
    $region18: #{tpu_custom_call.1} parent=1 // pred_check
      _
    $region19: #{tpu_custom_call.1} parent=1 // pred_check_branch
      %55 = sbr.rel (0) target = $region21
    $region20: #{tpu_custom_call.1} parent=1 // pred_region
      _
    $region21: #{tpu_custom_call.1} parent=1 // pred_fallthru
      _
    // Predicated region
    $region22: #{tpu_custom_call.1} parent=1 // pred_check
      _
    $region23: #{tpu_custom_call.1} parent=1 // pred_check_branch
      %57 = sbr.rel (0) target = $region25
    $region24: #{tpu_custom_call.1} parent=1 // pred_region
      %s59 = ssub.s32 8192, 8192
      %60 = vsyncadd [#allocation9], %s59
      %s61 = sshll.u32 [#allocation8], 4
      %s62 = int_to_ptr.vmem [resolvable:$true] %s61
      %67 = dma.hbm_to_vmem [thread:$0]  %s5, 8192, %s62, [#allocation9], 128, 128, 8
    $region25: #{tpu_custom_call.1} parent=1 // pred_fallthru
      _
    // Predicated region
    $region26: #{tpu_custom_call.1} parent=1 // pred_check
      _
    $region27: #{tpu_custom_call.1} parent=1 // pred_check_branch
      %69 = sbr.rel (0) target = $region29
    $region28: #{tpu_custom_call.1} parent=1 // pred_region
      _
    $region29: #{tpu_custom_call.1} parent=1 // pred_fallthru
      _
    // Predicated region
    $region30: #{tpu_custom_call.1} parent=1 // pred_check
      _
    $region31: #{tpu_custom_call.1} parent=1 // pred_check_branch
      %71 = sbr.rel (0) target = $region33
    $region32: #{tpu_custom_call.1} parent=1 // pred_region
      %s73 = ssub.s32 2048, 2048
      %74 = vsyncadd [#allocation9], %s73
      %s75 = sshll.u32 [#allocation10], 4
      %s76 = int_to_ptr.vmem [resolvable:$true] %s75
      %81 = dma.hbm_to_vmem [thread:$0]  %s7, 2048, %s76, [#allocation9], 128, 128, 8
    $region33: #{tpu_custom_call.1} parent=1 // pred_fallthru
      _
    // Predicated region
    $region34: #{tpu_custom_call.1} parent=1 // pred_check
      _
    $region35: #{tpu_custom_call.1} parent=1 // pred_check_branch
      %83 = sbr.rel (0) target = $region37
    $region36: #{tpu_custom_call.1} parent=1 // pred_region
      _
    $region37: #{tpu_custom_call.1} parent=1 // pred_fallthru
      _
    // Predicated region
    $region38: #{tpu_custom_call.1} parent=1 // pred_check
      _
    $region39: #{tpu_custom_call.1} parent=1 // pred_check_branch
      %85 = sbr.rel (0) target = $region41
    $region40: #{tpu_custom_call.1} parent=1 // pred_region
      %86 = dma.done [#allocation3], 32
    $region41: #{tpu_custom_call.1} parent=1 // pred_fallthru
      _
    // Predicated region
    $region42: #{tpu_custom_call.1} parent=1 // pred_check
      _
    $region43: #{tpu_custom_call.1} parent=1 // pred_check_branch
      %88 = sbr.rel (0) target = $region45
    $region44: #{tpu_custom_call.1} parent=1 // pred_region
      %89 = dma.done [#allocation6], 512
    $region45: #{tpu_custom_call.1} parent=1 // pred_fallthru
      _
    // Predicated region
    $region46: #{tpu_custom_call.1} parent=1 // pred_check
      _
    $region47: #{tpu_custom_call.1} parent=1 // pred_check_branch
      %91 = sbr.rel (0) target = $region49
    $region48: #{tpu_custom_call.1} parent=1 // pred_region
      %92 = dma.done [#allocation6], 16384
    $region49: #{tpu_custom_call.1} parent=1 // pred_fallthru
      _
    // Predicated region
    $region50: #{tpu_custom_call.1} parent=1 // pred_check
      _
    $region51: #{tpu_custom_call.1} parent=1 // pred_check_branch
      %94 = sbr.rel (0) target = $region53
    $region52: #{tpu_custom_call.1} parent=1 // pred_region
      %95 = dma.done [#allocation9], 8192
    $region53: #{tpu_custom_call.1} parent=1 // pred_fallthru
      _
    // Predicated region
    $region54: #{tpu_custom_call.1} parent=1 // pred_check
      _
    $region55: #{tpu_custom_call.1} parent=1 // pred_check_branch
      %97 = sbr.rel (0) target = $region57
    $region56: #{tpu_custom_call.1} parent=1 // pred_region
      %98 = dma.done [#allocation9], 2048
    $region57: #{tpu_custom_call.1} parent=1 // pred_fallthru
      _
    %v99 = vld [vmem:[#allocation2] sm:$0x3]
    %v100 = vld [vmem:[#allocation5] sm:$0xff]
    %v101 = vld [vmem:[#allocation5 + $0x8] sm:$0xff]
    %v102 = vld [vmem:[#allocation5 + $0x10] sm:$0xff]
    %v103 = vld [vmem:[#allocation5 + $0x18] sm:$0xff]
    %v104 = vld [vmem:[%s2] sm:$0x3]
    %v106 = vlaneseq
    %v107 = vshrl.u32 %v106, 7
    %v108 = vsub.s32 0, %v107
    %v109 = vrot.slane %v104, %v108
    %v110 = vlaneseq
    %v111 = vshrl.u32 %v110, 7
    %v112 = vsub.s32 1, %v111
    %v113 = vrot.slane %v104, %v112
    %vm116 = vcmask 130048
    %v118 = vsel %vm116, %v99, 0
    %120 = vmatprep.subr.mxu0 0.0
    %121 = vmatpush1.msra.mxu0 0.0
    %122 = vmatprep.subr.mxu0 0.0
    %123 = vmatpush1.msra.mxu0 0.0
    %124 = vmatprep.subr.mxu0 0.0
    %125 = vmatpush1.msra.mxu0 0.0
    %126 = vmatprep.subr.mxu0 0.0
    %127 = vmatpush1.msra.mxu0 0.0
    %128 = vmatprep.subr.mxu0 0.0
    %129 = vmatpush1.msra.mxu0 0.0
    %130 = vmatprep.subr.mxu0 0.0
    %131 = vmatpush1.msra.mxu0 0.0
    %132 = vmatprep.subr.mxu0 0.0
    %133 = vmatpush1.msra.mxu0 0.0
    %134 = vmatprep.subr.mxu0 0.0
    %135 = vmatpush1.msra.mxu0 0.0
    %136 = vmatprep.subr.mxu0 0.0
    %137 = vmatpush1.msra.mxu0 0.0
    %138 = vmatprep.subr.mxu0 0.0
    %139 = vmatpush1.msra.mxu0 0.0
    %140 = vmatprep.subr.mxu0 0.0
    %141 = vmatpush1.msra.mxu0 0.0
    %142 = vmatprep.subr.mxu0 0.0
    %143 = vmatpush1.msra.mxu0 0.0
    %144 = vmatprep.subr.mxu0 0.0
    %145 = vmatpush1.msra.mxu0 0.0
    %146 = vmatprep.subr.mxu0 0.0
    %147 = vmatpush1.msra.mxu0 0.0
    %148 = vmatprep.subr.mxu0 %v103
    %149 = vmatpush1.msra.mxu0 %v102
    %150 = vmatprep.subr.mxu0 %v101
    %151 = vmatpush1.msra.mxu0 %v100
    %152 = vmatprep.subr.mxu0 0.0
    %153 = vmatpush2.msra.mxu0 0.0
    %154 = vmatprep.subr.mxu0 0.0
    %155 = vmatpush2.msra.mxu0 0.0
    %156 = vmatprep.subr.mxu0 0.0
    %157 = vmatpush2.msra.mxu0 0.0
    %158 = vmatprep.subr.mxu0 0.0
    %159 = vmatpush2.msra.mxu0 0.0
    %160 = vmatprep.subr.mxu0 0.0
    %161 = vmatpush2.msra.mxu0 0.0
    %162 = vmatprep.subr.mxu0 0.0
    %163 = vmatpush2.msra.mxu0 0.0
    %164 = vmatprep.subr.mxu0 0.0
    %165 = vmatpush2.msra.mxu0 0.0
    %166 = vmatprep.subr.mxu0 0.0
    %167 = vmatpush2.msra.mxu0 0.0
    %168 = vmatprep.subr.mxu0 0.0
    %169 = vmatpush2.msra.mxu0 0.0
    %170 = vmatprep.subr.mxu0 0.0
    %171 = vmatpush2.msra.mxu0 0.0
    %172 = vmatprep.subr.mxu0 0.0
    %173 = vmatpush2.msra.mxu0 0.0
    %174 = vmatprep.subr.mxu0 0.0
    %175 = vmatpush2.msra.mxu0 0.0
    %176 = vmatprep.subr.mxu0 0.0
    %177 = vmatpush2.msra.mxu0 0.0
    %178 = vmatprep.subr.mxu0 0.0
    %179 = vmatpush2.msra.mxu0 0.0
    %180 = vmatprep.subr.mxu0 0.0
    %181 = vmatpush2.msra.mxu0 0.0
    %182 = vmatprep.subr.mxu0 0.0
    %183 = vmatpush2.msra.mxu0 0.0
    %184 = vmatprep.mubr.f32.mxu0 0.0
    %185 = vmatmul.mubr.f32.gmra.mxu0 %v118
    %v186 = vpop.f32.mrf.mxu0
    %v187 = vadd.f32 %v109, %v186
    %v188 = vpop.f32.mrf.mxu0
    %v189 = vadd.f32 %v113, %v188
    %190 = vdwg.mxu0
    %v191 = vmax.f32 %v187, 0.0
    %v192 = vmax.f32 %v189, 0.0
    %v193 = vld [vmem:[#allocation7] sm:$0xff]
    %v194 = vld [vmem:[#allocation7 + $0x8] sm:$0xff]
    %v195 = vld [vmem:[#allocation7 + $0x10] sm:$0xff]
    %v196 = vld [vmem:[#allocation7 + $0x18] sm:$0xff]
    %v197 = vld [vmem:[#allocation7 + $0x20] sm:$0xff]
    %v198 = vld [vmem:[#allocation7 + $0x28] sm:$0xff]
    %v199 = vld [vmem:[#allocation7 + $0x30] sm:$0xff]
    %v200 = vld [vmem:[#allocation7 + $0x38] sm:$0xff]
    %v201 = vld [vmem:[#allocation7 + $0x40] sm:$0xff]
    %v202 = vld [vmem:[#allocation7 + $0x48] sm:$0xff]
    %v203 = vld [vmem:[#allocation7 + $0x50] sm:$0xff]
    %v204 = vld [vmem:[#allocation7 + $0x58] sm:$0xff]
    %v205 = vld [vmem:[#allocation7 + $0x60] sm:$0xff]
    %v206 = vld [vmem:[#allocation7 + $0x68] sm:$0xff]
    %v207 = vld [vmem:[#allocation7 + $0x70] sm:$0xff]
    %v208 = vld [vmem:[#allocation7 + $0x78] sm:$0xff]
    %v209 = vld [vmem:[#allocation7 + $0x80] sm:$0xff]
    %v210 = vld [vmem:[#allocation7 + $0x88] sm:$0xff]
    %v211 = vld [vmem:[#allocation7 + $0x90] sm:$0xff]
    %v212 = vld [vmem:[#allocation7 + $0x98] sm:$0xff]
    %v213 = vld [vmem:[#allocation7 + $0xa0] sm:$0xff]
    %v214 = vld [vmem:[#allocation7 + $0xa8] sm:$0xff]
    %v215 = vld [vmem:[#allocation7 + $0xb0] sm:$0xff]
    %v216 = vld [vmem:[#allocation7 + $0xb8] sm:$0xff]
    %v217 = vld [vmem:[#allocation7 + $0xc0] sm:$0xff]
    %v218 = vld [vmem:[#allocation7 + $0xc8] sm:$0xff]
    %v219 = vld [vmem:[#allocation7 + $0xd0] sm:$0xff]
    %v220 = vld [vmem:[#allocation7 + $0xd8] sm:$0xff]
    %v221 = vld [vmem:[#allocation7 + $0xe0] sm:$0xff]
    %v222 = vld [vmem:[#allocation7 + $0xe8] sm:$0xff]
    %v223 = vld [vmem:[#allocation7 + $0xf0] sm:$0xff]
    %v224 = vld [vmem:[#allocation7 + $0xf8] sm:$0xff]
    %v225 = vld [vmem:[#allocation7 + $0x100] sm:$0xff]
    %v226 = vld [vmem:[#allocation7 + $0x108] sm:$0xff]
    %v227 = vld [vmem:[#allocation7 + $0x110] sm:$0xff]
    %v228 = vld [vmem:[#allocation7 + $0x118] sm:$0xff]
    %v229 = vld [vmem:[#allocation7 + $0x120] sm:$0xff]
    %v230 = vld [vmem:[#allocation7 + $0x128] sm:$0xff]
    %v231 = vld [vmem:[#allocation7 + $0x130] sm:$0xff]
    %v232 = vld [vmem:[#allocation7 + $0x138] sm:$0xff]
    %v233 = vld [vmem:[#allocation7 + $0x140] sm:$0xff]
    %v234 = vld [vmem:[#allocation7 + $0x148] sm:$0xff]
    %v235 = vld [vmem:[#allocation7 + $0x150] sm:$0xff]
    %v236 = vld [vmem:[#allocation7 + $0x158] sm:$0xff]
    %v237 = vld [vmem:[#allocation7 + $0x160] sm:$0xff]
    %v238 = vld [vmem:[#allocation7 + $0x168] sm:$0xff]
    %v239 = vld [vmem:[#allocation7 + $0x170] sm:$0xff]
    %v240 = vld [vmem:[#allocation7 + $0x178] sm:$0xff]
    %v241 = vld [vmem:[#allocation7 + $0x180] sm:$0xff]
    %v242 = vld [vmem:[#allocation7 + $0x188] sm:$0xff]
    %v243 = vld [vmem:[#allocation7 + $0x190] sm:$0xff]
    %v244 = vld [vmem:[#allocation7 + $0x198] sm:$0xff]
    %v245 = vld [vmem:[#allocation7 + $0x1a0] sm:$0xff]
    %v246 = vld [vmem:[#allocation7 + $0x1a8] sm:$0xff]
    %v247 = vld [vmem:[#allocation7 + $0x1b0] sm:$0xff]
    %v248 = vld [vmem:[#allocation7 + $0x1b8] sm:$0xff]
    %v249 = vld [vmem:[#allocation7 + $0x1c0] sm:$0xff]
    %v250 = vld [vmem:[#allocation7 + $0x1c8] sm:$0xff]
    %v251 = vld [vmem:[#allocation7 + $0x1d0] sm:$0xff]
    %v252 = vld [vmem:[#allocation7 + $0x1d8] sm:$0xff]
    %v253 = vld [vmem:[#allocation7 + $0x1e0] sm:$0xff]
    %v254 = vld [vmem:[#allocation7 + $0x1e8] sm:$0xff]
    %v255 = vld [vmem:[#allocation7 + $0x1f0] sm:$0xff]
    %v256 = vld [vmem:[#allocation7 + $0x1f8] sm:$0xff]
    %v257 = vld [vmem:[#allocation7 + $0x200] sm:$0xff]
    %v258 = vld [vmem:[#allocation7 + $0x208] sm:$0xff]
    %v259 = vld [vmem:[#allocation7 + $0x210] sm:$0xff]
    %v260 = vld [vmem:[#allocation7 + $0x218] sm:$0xff]
    %v261 = vld [vmem:[#allocation7 + $0x220] sm:$0xff]
    %v262 = vld [vmem:[#allocation7 + $0x228] sm:$0xff]
    %v263 = vld [vmem:[#allocation7 + $0x230] sm:$0xff]
    %v264 = vld [vmem:[#allocation7 + $0x238] sm:$0xff]
    %v265 = vld [vmem:[#allocation7 + $0x240] sm:$0xff]
    %v266 = vld [vmem:[#allocation7 + $0x248] sm:$0xff]
    %v267 = vld [vmem:[#allocation7 + $0x250] sm:$0xff]
    %v268 = vld [vmem:[#allocation7 + $0x258] sm:$0xff]
    %v269 = vld [vmem:[#allocation7 + $0x260] sm:$0xff]
    %v270 = vld [vmem:[#allocation7 + $0x268] sm:$0xff]
    %v271 = vld [vmem:[#allocation7 + $0x270] sm:$0xff]
    %v272 = vld [vmem:[#allocation7 + $0x278] sm:$0xff]
    %v273 = vld [vmem:[#allocation7 + $0x280] sm:$0xff]
    %v274 = vld [vmem:[#allocation7 + $0x288] sm:$0xff]
    %v275 = vld [vmem:[#allocation7 + $0x290] sm:$0xff]
    %v276 = vld [vmem:[#allocation7 + $0x298] sm:$0xff]
    %v277 = vld [vmem:[#allocation7 + $0x2a0] sm:$0xff]
    %v278 = vld [vmem:[#allocation7 + $0x2a8] sm:$0xff]
    %v279 = vld [vmem:[#allocation7 + $0x2b0] sm:$0xff]
    %v280 = vld [vmem:[#allocation7 + $0x2b8] sm:$0xff]
    %v281 = vld [vmem:[#allocation7 + $0x2c0] sm:$0xff]
    %v282 = vld [vmem:[#allocation7 + $0x2c8] sm:$0xff]
    %v283 = vld [vmem:[#allocation7 + $0x2d0] sm:$0xff]
    %v284 = vld [vmem:[#allocation7 + $0x2d8] sm:$0xff]
    %v285 = vld [vmem:[#allocation7 + $0x2e0] sm:$0xff]
    %v286 = vld [vmem:[#allocation7 + $0x2e8] sm:$0xff]
    %v287 = vld [vmem:[#allocation7 + $0x2f0] sm:$0xff]
    %v288 = vld [vmem:[#allocation7 + $0x2f8] sm:$0xff]
    %v289 = vld [vmem:[#allocation7 + $0x300] sm:$0xff]
    %v290 = vld [vmem:[#allocation7 + $0x308] sm:$0xff]
    %v291 = vld [vmem:[#allocation7 + $0x310] sm:$0xff]
    %v292 = vld [vmem:[#allocation7 + $0x318] sm:$0xff]
    %v293 = vld [vmem:[#allocation7 + $0x320] sm:$0xff]
    %v294 = vld [vmem:[#allocation7 + $0x328] sm:$0xff]
    %v295 = vld [vmem:[#allocation7 + $0x330] sm:$0xff]
    %v296 = vld [vmem:[#allocation7 + $0x338] sm:$0xff]
    %v297 = vld [vmem:[#allocation7 + $0x340] sm:$0xff]
    %v298 = vld [vmem:[#allocation7 + $0x348] sm:$0xff]
    %v299 = vld [vmem:[#allocation7 + $0x350] sm:$0xff]
    %v300 = vld [vmem:[#allocation7 + $0x358] sm:$0xff]
    %v301 = vld [vmem:[#allocation7 + $0x360] sm:$0xff]
    %v302 = vld [vmem:[#allocation7 + $0x368] sm:$0xff]
    %v303 = vld [vmem:[#allocation7 + $0x370] sm:$0xff]
    %v304 = vld [vmem:[#allocation7 + $0x378] sm:$0xff]
    %v305 = vld [vmem:[#allocation7 + $0x380] sm:$0xff]
    %v306 = vld [vmem:[#allocation7 + $0x388] sm:$0xff]
    %v307 = vld [vmem:[#allocation7 + $0x390] sm:$0xff]
    %v308 = vld [vmem:[#allocation7 + $0x398] sm:$0xff]
    %v309 = vld [vmem:[#allocation7 + $0x3a0] sm:$0xff]
    %v310 = vld [vmem:[#allocation7 + $0x3a8] sm:$0xff]
    %v311 = vld [vmem:[#allocation7 + $0x3b0] sm:$0xff]
    %v312 = vld [vmem:[#allocation7 + $0x3b8] sm:$0xff]
    %v313 = vld [vmem:[#allocation7 + $0x3c0] sm:$0xff]
    %v314 = vld [vmem:[#allocation7 + $0x3c8] sm:$0xff]
    %v315 = vld [vmem:[#allocation7 + $0x3d0] sm:$0xff]
    %v316 = vld [vmem:[#allocation7 + $0x3d8] sm:$0xff]
    %v317 = vld [vmem:[#allocation7 + $0x3e0] sm:$0xff]
    %v318 = vld [vmem:[#allocation7 + $0x3e8] sm:$0xff]
    %v319 = vld [vmem:[#allocation7 + $0x3f0] sm:$0xff]
    %v320 = vld [vmem:[#allocation7 + $0x3f8] sm:$0xff]
    %v321 = vld [vmem:[%s4] sm:$0xf]
    %v323 = vlaneseq
    %v324 = vshrl.u32 %v323, 7
    %v325 = vsub.s32 0, %v324
    %v326 = vrot.slane %v321, %v325
    %v327 = vlaneseq
    %v328 = vshrl.u32 %v327, 7
    %v329 = vsub.s32 1, %v328
    %v330 = vrot.slane %v321, %v329
    %v331 = vlaneseq
    %v332 = vshrl.u32 %v331, 7
    %v333 = vsub.s32 2, %v332
    %v334 = vrot.slane %v321, %v333
    %v335 = vlaneseq
    %v336 = vshrl.u32 %v335, 7
    %v337 = vsub.s32 3, %v336
    %v338 = vrot.slane %v321, %v337
    %343 = vmatprep.subr.mxu0 %v254
    %344 = vmatpush1.msra.mxu0 %v253
    %345 = vmatprep.subr.mxu0 %v250
    %346 = vmatpush1.msra.mxu0 %v249
    %347 = vmatprep.subr.mxu0 %v246
    %348 = vmatpush1.msra.mxu0 %v245
    %349 = vmatprep.subr.mxu0 %v242
    %350 = vmatpush1.msra.mxu0 %v241
    %351 = vmatprep.subr.mxu0 %v238
    %352 = vmatpush1.msra.mxu0 %v237
    %353 = vmatprep.subr.mxu0 %v234
    %354 = vmatpush1.msra.mxu0 %v233
    %355 = vmatprep.subr.mxu0 %v230
    %356 = vmatpush1.msra.mxu0 %v229
    %357 = vmatprep.subr.mxu0 %v226
    %358 = vmatpush1.msra.mxu0 %v225
    %359 = vmatprep.subr.mxu0 %v222
    %360 = vmatpush1.msra.mxu0 %v221
    %361 = vmatprep.subr.mxu0 %v218
    %362 = vmatpush1.msra.mxu0 %v217
    %363 = vmatprep.subr.mxu0 %v214
    %364 = vmatpush1.msra.mxu0 %v213
    %365 = vmatprep.subr.mxu0 %v210
    %366 = vmatpush1.msra.mxu0 %v209
    %367 = vmatprep.subr.mxu0 %v206
    %368 = vmatpush1.msra.mxu0 %v205
    %369 = vmatprep.subr.mxu0 %v202
    %370 = vmatpush1.msra.mxu0 %v201
    %371 = vmatprep.subr.mxu0 %v198
    %372 = vmatpush1.msra.mxu0 %v197
    %373 = vmatprep.subr.mxu0 %v194
    %374 = vmatpush1.msra.mxu0 %v193
    %375 = vmatprep.subr.mxu0 %v318
    %376 = vmatpush2.msra.mxu0 %v317
    %377 = vmatprep.subr.mxu0 %v314
    %378 = vmatpush2.msra.mxu0 %v313
    %379 = vmatprep.subr.mxu0 %v310
    %380 = vmatpush2.msra.mxu0 %v309
    %381 = vmatprep.subr.mxu0 %v306
    %382 = vmatpush2.msra.mxu0 %v305
    %383 = vmatprep.subr.mxu0 %v302
    %384 = vmatpush2.msra.mxu0 %v301
    %385 = vmatprep.subr.mxu0 %v298
    %386 = vmatpush2.msra.mxu0 %v297
    %387 = vmatprep.subr.mxu0 %v294
    %388 = vmatpush2.msra.mxu0 %v293
    %389 = vmatprep.subr.mxu0 %v290
    %390 = vmatpush2.msra.mxu0 %v289
    %391 = vmatprep.subr.mxu0 %v286
    %392 = vmatpush2.msra.mxu0 %v285
    %393 = vmatprep.subr.mxu0 %v282
    %394 = vmatpush2.msra.mxu0 %v281
    %395 = vmatprep.subr.mxu0 %v278
    %396 = vmatpush2.msra.mxu0 %v277
    %397 = vmatprep.subr.mxu0 %v274
    %398 = vmatpush2.msra.mxu0 %v273
    %399 = vmatprep.subr.mxu0 %v270
    %400 = vmatpush2.msra.mxu0 %v269
    %401 = vmatprep.subr.mxu0 %v266
    %402 = vmatpush2.msra.mxu0 %v265
    %403 = vmatprep.subr.mxu0 %v262
    %404 = vmatpush2.msra.mxu0 %v261
    %405 = vmatprep.subr.mxu0 %v258
    %406 = vmatpush2.msra.mxu0 %v257
    %407 = vmatprep.mubr.f32.mxu0 %v192
    %408 = vmatmul.mubr.f32.gmra.mxu0 %v191
    %v409 = vpop.f32.mrf.mxu0
    %v410 = vadd.f32 %v326, %v409
    %v411 = vpop.f32.mrf.mxu0
    %v412 = vadd.f32 %v330, %v411
    %413 = vdwg.mxu0
    %414 = vmatprep.subr.mxu0 %v256
    %415 = vmatpush1.msra.mxu0 %v255
    %416 = vmatprep.subr.mxu0 %v252
    %417 = vmatpush1.msra.mxu0 %v251
    %418 = vmatprep.subr.mxu0 %v248
    %419 = vmatpush1.msra.mxu0 %v247
    %420 = vmatprep.subr.mxu0 %v244
    %421 = vmatpush1.msra.mxu0 %v243
    %422 = vmatprep.subr.mxu0 %v240
    %423 = vmatpush1.msra.mxu0 %v239
    %424 = vmatprep.subr.mxu0 %v236
    %425 = vmatpush1.msra.mxu0 %v235
    %426 = vmatprep.subr.mxu0 %v232
    %427 = vmatpush1.msra.mxu0 %v231
    %428 = vmatprep.subr.mxu0 %v228
    %429 = vmatpush1.msra.mxu0 %v227
    %430 = vmatprep.subr.mxu0 %v224
    %431 = vmatpush1.msra.mxu0 %v223
    %432 = vmatprep.subr.mxu0 %v220
    %433 = vmatpush1.msra.mxu0 %v219
    %434 = vmatprep.subr.mxu0 %v216
    %435 = vmatpush1.msra.mxu0 %v215
    %436 = vmatprep.subr.mxu0 %v212
    %437 = vmatpush1.msra.mxu0 %v211
    %438 = vmatprep.subr.mxu0 %v208
    %439 = vmatpush1.msra.mxu0 %v207
    %440 = vmatprep.subr.mxu0 %v204
    %441 = vmatpush1.msra.mxu0 %v203
    %442 = vmatprep.subr.mxu0 %v200
    %443 = vmatpush1.msra.mxu0 %v199
    %444 = vmatprep.subr.mxu0 %v196
    %445 = vmatpush1.msra.mxu0 %v195
    %446 = vmatprep.subr.mxu0 %v320
    %447 = vmatpush2.msra.mxu0 %v319
    %448 = vmatprep.subr.mxu0 %v316
    %449 = vmatpush2.msra.mxu0 %v315
    %450 = vmatprep.subr.mxu0 %v312
    %451 = vmatpush2.msra.mxu0 %v311
    %452 = vmatprep.subr.mxu0 %v308
    %453 = vmatpush2.msra.mxu0 %v307
    %454 = vmatprep.subr.mxu0 %v304
    %455 = vmatpush2.msra.mxu0 %v303
    %456 = vmatprep.subr.mxu0 %v300
    %457 = vmatpush2.msra.mxu0 %v299
    %458 = vmatprep.subr.mxu0 %v296
    %459 = vmatpush2.msra.mxu0 %v295
    %460 = vmatprep.subr.mxu0 %v292
    %461 = vmatpush2.msra.mxu0 %v291
    %462 = vmatprep.subr.mxu0 %v288
    %463 = vmatpush2.msra.mxu0 %v287
    %464 = vmatprep.subr.mxu0 %v284
    %465 = vmatpush2.msra.mxu0 %v283
    %466 = vmatprep.subr.mxu0 %v280
    %467 = vmatpush2.msra.mxu0 %v279
    %468 = vmatprep.subr.mxu0 %v276
    %469 = vmatpush2.msra.mxu0 %v275
    %470 = vmatprep.subr.mxu0 %v272
    %471 = vmatpush2.msra.mxu0 %v271
    %472 = vmatprep.subr.mxu0 %v268
    %473 = vmatpush2.msra.mxu0 %v267
    %474 = vmatprep.subr.mxu0 %v264
    %475 = vmatpush2.msra.mxu0 %v263
    %476 = vmatprep.subr.mxu0 %v260
    %477 = vmatpush2.msra.mxu0 %v259
    %478 = vmatprep.mubr.f32.mxu0 %v192
    %479 = vmatmul.mubr.f32.gmra.mxu0 %v191
    %v480 = vpop.f32.mrf.mxu0
    %v481 = vadd.f32 %v334, %v480
    %v482 = vpop.f32.mrf.mxu0
    %v483 = vadd.f32 %v338, %v482
    %484 = vdwg.mxu0
    %v485 = vmax.f32 %v410, 0.0
    %v486 = vmax.f32 %v412, 0.0
    %v487 = vmax.f32 %v481, 0.0
    %v488 = vmax.f32 %v483, 0.0
    %v489 = vld [vmem:[#allocation8] sm:$0xff]
    %v490 = vld [vmem:[#allocation8 + $0x8] sm:$0xff]
    %v491 = vld [vmem:[#allocation8 + $0x10] sm:$0xff]
    %v492 = vld [vmem:[#allocation8 + $0x18] sm:$0xff]
    %v493 = vld [vmem:[#allocation8 + $0x20] sm:$0xff]
    %v494 = vld [vmem:[#allocation8 + $0x28] sm:$0xff]
    %v495 = vld [vmem:[#allocation8 + $0x30] sm:$0xff]
    %v496 = vld [vmem:[#allocation8 + $0x38] sm:$0xff]
    %v497 = vld [vmem:[#allocation8 + $0x40] sm:$0xff]
    %v498 = vld [vmem:[#allocation8 + $0x48] sm:$0xff]
    %v499 = vld [vmem:[#allocation8 + $0x50] sm:$0xff]
    %v500 = vld [vmem:[#allocation8 + $0x58] sm:$0xff]
    %v501 = vld [vmem:[#allocation8 + $0x60] sm:$0xff]
    %v502 = vld [vmem:[#allocation8 + $0x68] sm:$0xff]
    %v503 = vld [vmem:[#allocation8 + $0x70] sm:$0xff]
    %v504 = vld [vmem:[#allocation8 + $0x78] sm:$0xff]
    %v505 = vld [vmem:[#allocation8 + $0x80] sm:$0xff]
    %v506 = vld [vmem:[#allocation8 + $0x88] sm:$0xff]
    %v507 = vld [vmem:[#allocation8 + $0x90] sm:$0xff]
    %v508 = vld [vmem:[#allocation8 + $0x98] sm:$0xff]
    %v509 = vld [vmem:[#allocation8 + $0xa0] sm:$0xff]
    %v510 = vld [vmem:[#allocation8 + $0xa8] sm:$0xff]
    %v511 = vld [vmem:[#allocation8 + $0xb0] sm:$0xff]
    %v512 = vld [vmem:[#allocation8 + $0xb8] sm:$0xff]
    %v513 = vld [vmem:[#allocation8 + $0xc0] sm:$0xff]
    %v514 = vld [vmem:[#allocation8 + $0xc8] sm:$0xff]
    %v515 = vld [vmem:[#allocation8 + $0xd0] sm:$0xff]
    %v516 = vld [vmem:[#allocation8 + $0xd8] sm:$0xff]
    %v517 = vld [vmem:[#allocation8 + $0xe0] sm:$0xff]
    %v518 = vld [vmem:[#allocation8 + $0xe8] sm:$0xff]
    %v519 = vld [vmem:[#allocation8 + $0xf0] sm:$0xff]
    %v520 = vld [vmem:[#allocation8 + $0xf8] sm:$0xff]
    %v521 = vld [vmem:[#allocation8 + $0x100] sm:$0xff]
    %v522 = vld [vmem:[#allocation8 + $0x108] sm:$0xff]
    %v523 = vld [vmem:[#allocation8 + $0x110] sm:$0xff]
    %v524 = vld [vmem:[#allocation8 + $0x118] sm:$0xff]
    %v525 = vld [vmem:[#allocation8 + $0x120] sm:$0xff]
    %v526 = vld [vmem:[#allocation8 + $0x128] sm:$0xff]
    %v527 = vld [vmem:[#allocation8 + $0x130] sm:$0xff]
    %v528 = vld [vmem:[#allocation8 + $0x138] sm:$0xff]
    %v529 = vld [vmem:[#allocation8 + $0x140] sm:$0xff]
    %v530 = vld [vmem:[#allocation8 + $0x148] sm:$0xff]
    %v531 = vld [vmem:[#allocation8 + $0x150] sm:$0xff]
    %v532 = vld [vmem:[#allocation8 + $0x158] sm:$0xff]
    %v533 = vld [vmem:[#allocation8 + $0x160] sm:$0xff]
    %v534 = vld [vmem:[#allocation8 + $0x168] sm:$0xff]
    %v535 = vld [vmem:[#allocation8 + $0x170] sm:$0xff]
    %v536 = vld [vmem:[#allocation8 + $0x178] sm:$0xff]
    %v537 = vld [vmem:[#allocation8 + $0x180] sm:$0xff]
    %v538 = vld [vmem:[#allocation8 + $0x188] sm:$0xff]
    %v539 = vld [vmem:[#allocation8 + $0x190] sm:$0xff]
    %v540 = vld [vmem:[#allocation8 + $0x198] sm:$0xff]
    %v541 = vld [vmem:[#allocation8 + $0x1a0] sm:$0xff]
    %v542 = vld [vmem:[#allocation8 + $0x1a8] sm:$0xff]
    %v543 = vld [vmem:[#allocation8 + $0x1b0] sm:$0xff]
    %v544 = vld [vmem:[#allocation8 + $0x1b8] sm:$0xff]
    %v545 = vld [vmem:[#allocation8 + $0x1c0] sm:$0xff]
    %v546 = vld [vmem:[#allocation8 + $0x1c8] sm:$0xff]
    %v547 = vld [vmem:[#allocation8 + $0x1d0] sm:$0xff]
    %v548 = vld [vmem:[#allocation8 + $0x1d8] sm:$0xff]
    %v549 = vld [vmem:[#allocation8 + $0x1e0] sm:$0xff]
    %v550 = vld [vmem:[#allocation8 + $0x1e8] sm:$0xff]
    %v551 = vld [vmem:[#allocation8 + $0x1f0] sm:$0xff]
    %v552 = vld [vmem:[#allocation8 + $0x1f8] sm:$0xff]
    %v553 = vld [vmem:[%s6] sm:$0x1]
    %v555 = vlaneseq
    %v556 = vshrl.u32 %v555, 7
    %v557 = vsub.s32 0, %v556
    %v558 = vrot.slane %v553, %v557
    %560 = vmatprep.subr.mxu0 0.0
    %561 = vmatpush1.msra.mxu0 %v504
    %562 = vmatprep.subr.mxu0 0.0
    %563 = vmatpush1.msra.mxu0 %v503
    %564 = vmatprep.subr.mxu0 0.0
    %565 = vmatpush1.msra.mxu0 %v502
    %566 = vmatprep.subr.mxu0 0.0
    %567 = vmatpush1.msra.mxu0 %v501
    %568 = vmatprep.subr.mxu0 0.0
    %569 = vmatpush1.msra.mxu0 %v500
    %570 = vmatprep.subr.mxu0 0.0
    %571 = vmatpush1.msra.mxu0 %v499
    %572 = vmatprep.subr.mxu0 0.0
    %573 = vmatpush1.msra.mxu0 %v498
    %574 = vmatprep.subr.mxu0 0.0
    %575 = vmatpush1.msra.mxu0 %v497
    %576 = vmatprep.subr.mxu0 0.0
    %577 = vmatpush1.msra.mxu0 %v496
    %578 = vmatprep.subr.mxu0 0.0
    %579 = vmatpush1.msra.mxu0 %v495
    %580 = vmatprep.subr.mxu0 0.0
    %581 = vmatpush1.msra.mxu0 %v494
    %582 = vmatprep.subr.mxu0 0.0
    %583 = vmatpush1.msra.mxu0 %v493
    %584 = vmatprep.subr.mxu0 0.0
    %585 = vmatpush1.msra.mxu0 %v492
    %586 = vmatprep.subr.mxu0 0.0
    %587 = vmatpush1.msra.mxu0 %v491
    %588 = vmatprep.subr.mxu0 0.0
    %589 = vmatpush1.msra.mxu0 %v490
    %590 = vmatprep.subr.mxu0 0.0
    %591 = vmatpush1.msra.mxu0 %v489
    %592 = vmatprep.subr.mxu0 0.0
    %593 = vmatpush2.msra.mxu0 %v520
    %594 = vmatprep.subr.mxu0 0.0
    %595 = vmatpush2.msra.mxu0 %v519
    %596 = vmatprep.subr.mxu0 0.0
    %597 = vmatpush2.msra.mxu0 %v518
    %598 = vmatprep.subr.mxu0 0.0
    %599 = vmatpush2.msra.mxu0 %v517
    %600 = vmatprep.subr.mxu0 0.0
    %601 = vmatpush2.msra.mxu0 %v516
    %602 = vmatprep.subr.mxu0 0.0
    %603 = vmatpush2.msra.mxu0 %v515
    %604 = vmatprep.subr.mxu0 0.0
    %605 = vmatpush2.msra.mxu0 %v514
    %606 = vmatprep.subr.mxu0 0.0
    %607 = vmatpush2.msra.mxu0 %v513
    %608 = vmatprep.subr.mxu0 0.0
    %609 = vmatpush2.msra.mxu0 %v512
    %610 = vmatprep.subr.mxu0 0.0
    %611 = vmatpush2.msra.mxu0 %v511
    %612 = vmatprep.subr.mxu0 0.0
    %613 = vmatpush2.msra.mxu0 %v510
    %614 = vmatprep.subr.mxu0 0.0
    %615 = vmatpush2.msra.mxu0 %v509
    %616 = vmatprep.subr.mxu0 0.0
    %617 = vmatpush2.msra.mxu0 %v508
    %618 = vmatprep.subr.mxu0 0.0
    %619 = vmatpush2.msra.mxu0 %v507
    %620 = vmatprep.subr.mxu0 0.0
    %621 = vmatpush2.msra.mxu0 %v506
    %622 = vmatprep.subr.mxu0 0.0
    %623 = vmatpush2.msra.mxu0 %v505
    %624 = vmatprep.mubr.f32.mxu0 %v486
    %625 = vmatmul.mubr.f32.gmra.mxu0 %v485
    %v626 = vpop.f32.mrf.mxu0
    %v627 = vadd.f32 %v558, %v626
    %v628 = vpop.f32.mrf.mxu0
    %629 = vdwg.mxu0
    %630 = vmatprep.subr.mxu0 0.0
    %631 = vmatpush1.msra.mxu0 %v536
    %632 = vmatprep.subr.mxu0 0.0
    %633 = vmatpush1.msra.mxu0 %v535
    %634 = vmatprep.subr.mxu0 0.0
    %635 = vmatpush1.msra.mxu0 %v534
    %636 = vmatprep.subr.mxu0 0.0
    %637 = vmatpush1.msra.mxu0 %v533
    %638 = vmatprep.subr.mxu0 0.0
    %639 = vmatpush1.msra.mxu0 %v532
    %640 = vmatprep.subr.mxu0 0.0
    %641 = vmatpush1.msra.mxu0 %v531
    %642 = vmatprep.subr.mxu0 0.0
    %643 = vmatpush1.msra.mxu0 %v530
    %644 = vmatprep.subr.mxu0 0.0
    %645 = vmatpush1.msra.mxu0 %v529
    %646 = vmatprep.subr.mxu0 0.0
    %647 = vmatpush1.msra.mxu0 %v528
    %648 = vmatprep.subr.mxu0 0.0
    %649 = vmatpush1.msra.mxu0 %v527
    %650 = vmatprep.subr.mxu0 0.0
    %651 = vmatpush1.msra.mxu0 %v526
    %652 = vmatprep.subr.mxu0 0.0
    %653 = vmatpush1.msra.mxu0 %v525
    %654 = vmatprep.subr.mxu0 0.0
    %655 = vmatpush1.msra.mxu0 %v524
    %656 = vmatprep.subr.mxu0 0.0
    %657 = vmatpush1.msra.mxu0 %v523
    %658 = vmatprep.subr.mxu0 0.0
    %659 = vmatpush1.msra.mxu0 %v522
    %660 = vmatprep.subr.mxu0 0.0
    %661 = vmatpush1.msra.mxu0 %v521
    %662 = vmatprep.subr.mxu0 0.0
    %663 = vmatpush2.msra.mxu0 %v552
    %664 = vmatprep.subr.mxu0 0.0
    %665 = vmatpush2.msra.mxu0 %v551
    %666 = vmatprep.subr.mxu0 0.0
    %667 = vmatpush2.msra.mxu0 %v550
    %668 = vmatprep.subr.mxu0 0.0
    %669 = vmatpush2.msra.mxu0 %v549
    %670 = vmatprep.subr.mxu0 0.0
    %671 = vmatpush2.msra.mxu0 %v548
    %672 = vmatprep.subr.mxu0 0.0
    %673 = vmatpush2.msra.mxu0 %v547
    %674 = vmatprep.subr.mxu0 0.0
    %675 = vmatpush2.msra.mxu0 %v546
    %676 = vmatprep.subr.mxu0 0.0
    %677 = vmatpush2.msra.mxu0 %v545
    %678 = vmatprep.subr.mxu0 0.0
    %679 = vmatpush2.msra.mxu0 %v544
    %680 = vmatprep.subr.mxu0 0.0
    %681 = vmatpush2.msra.mxu0 %v543
    %682 = vmatprep.subr.mxu0 0.0
    %683 = vmatpush2.msra.mxu0 %v542
    %684 = vmatprep.subr.mxu0 0.0
    %685 = vmatpush2.msra.mxu0 %v541
    %686 = vmatprep.subr.mxu0 0.0
    %687 = vmatpush2.msra.mxu0 %v540
    %688 = vmatprep.subr.mxu0 0.0
    %689 = vmatpush2.msra.mxu0 %v539
    %690 = vmatprep.subr.mxu0 0.0
    %691 = vmatpush2.msra.mxu0 %v538
    %692 = vmatprep.subr.mxu0 0.0
    %693 = vmatpush2.msra.mxu0 %v537
    %694 = vmatprep.mubr.f32.mxu0 %v488
    %695 = vmatmul.mubr.f32.gmra.mxu0 %v487
    %v696 = vpop.f32.mrf.mxu0
    %v697 = vadd.f32 %v627, %v696
    %v698 = vpop.f32.mrf.mxu0
    %699 = vdwg.mxu0
    %v700 = vmax.f32 %v697, 0.0
    %v701 = vld [vmem:[#allocation10] sm:$0xff]
    %v702 = vld [vmem:[#allocation10 + $0x8] sm:$0xff]
    %v703 = vld [vmem:[#allocation10 + $0x10] sm:$0xff]
    %v704 = vld [vmem:[#allocation10 + $0x18] sm:$0xff]
    %v705 = vld [vmem:[#allocation10 + $0x20] sm:$0xff]
    %v706 = vld [vmem:[#allocation10 + $0x28] sm:$0xff]
    %v707 = vld [vmem:[#allocation10 + $0x30] sm:$0xff]
    %v708 = vld [vmem:[#allocation10 + $0x38] sm:$0xff]
    %v709 = vld [vmem:[#allocation10 + $0x40] sm:$0xff]
    %v710 = vld [vmem:[#allocation10 + $0x48] sm:$0xff]
    %v711 = vld [vmem:[#allocation10 + $0x50] sm:$0xff]
    %v712 = vld [vmem:[#allocation10 + $0x58] sm:$0xff]
    %v713 = vld [vmem:[#allocation10 + $0x60] sm:$0xff]
    %v714 = vld [vmem:[#allocation10 + $0x68] sm:$0xff]
    %v715 = vld [vmem:[#allocation10 + $0x70] sm:$0xff]
    %v716 = vld [vmem:[#allocation10 + $0x78] sm:$0xff]
    %v717 = vld [vmem:[%s8] sm:$0x1]
    %v719 = vlaneseq
    %v720 = vshrl.u32 %v719, 7
    %v721 = vsub.s32 0, %v720
    %v722 = vrot.slane %v717, %v721
    %724 = vmatprep.subr.mxu0 0.0
    %725 = vmatpush1.msra.mxu0 %v716
    %726 = vmatprep.subr.mxu0 0.0
    %727 = vmatpush1.msra.mxu0 %v715
    %728 = vmatprep.subr.mxu0 0.0
    %729 = vmatpush1.msra.mxu0 %v714
    %730 = vmatprep.subr.mxu0 0.0
    %731 = vmatpush1.msra.mxu0 %v713
    %732 = vmatprep.subr.mxu0 0.0
    %733 = vmatpush1.msra.mxu0 %v712
    %734 = vmatprep.subr.mxu0 0.0
    %735 = vmatpush1.msra.mxu0 %v711
    %736 = vmatprep.subr.mxu0 0.0
    %737 = vmatpush1.msra.mxu0 %v710
    %738 = vmatprep.subr.mxu0 0.0
    %739 = vmatpush1.msra.mxu0 %v709
    %740 = vmatprep.subr.mxu0 0.0
    %741 = vmatpush1.msra.mxu0 %v708
    %742 = vmatprep.subr.mxu0 0.0
    %743 = vmatpush1.msra.mxu0 %v707
    %744 = vmatprep.subr.mxu0 0.0
    %745 = vmatpush1.msra.mxu0 %v706
    %746 = vmatprep.subr.mxu0 0.0
    %747 = vmatpush1.msra.mxu0 %v705
    %748 = vmatprep.subr.mxu0 0.0
    %749 = vmatpush1.msra.mxu0 %v704
    %750 = vmatprep.subr.mxu0 0.0
    %751 = vmatpush1.msra.mxu0 %v703
    %752 = vmatprep.subr.mxu0 0.0
    %753 = vmatpush1.msra.mxu0 %v702
    %754 = vmatprep.subr.mxu0 0.0
    %755 = vmatpush1.msra.mxu0 %v701
    %756 = vmatprep.subr.mxu0 0.0
    %757 = vmatpush2.msra.mxu0 0.0
    %758 = vmatprep.subr.mxu0 0.0
    %759 = vmatpush2.msra.mxu0 0.0
    %760 = vmatprep.subr.mxu0 0.0
    %761 = vmatpush2.msra.mxu0 0.0
    %762 = vmatprep.subr.mxu0 0.0
    %763 = vmatpush2.msra.mxu0 0.0
    %764 = vmatprep.subr.mxu0 0.0
    %765 = vmatpush2.msra.mxu0 0.0
    %766 = vmatprep.subr.mxu0 0.0
    %767 = vmatpush2.msra.mxu0 0.0
    %768 = vmatprep.subr.mxu0 0.0
    %769 = vmatpush2.msra.mxu0 0.0
    %770 = vmatprep.subr.mxu0 0.0
    %771 = vmatpush2.msra.mxu0 0.0
    %772 = vmatprep.subr.mxu0 0.0
    %773 = vmatpush2.msra.mxu0 0.0
    %774 = vmatprep.subr.mxu0 0.0
    %775 = vmatpush2.msra.mxu0 0.0
    %776 = vmatprep.subr.mxu0 0.0
    %777 = vmatpush2.msra.mxu0 0.0
    %778 = vmatprep.subr.mxu0 0.0
    %779 = vmatpush2.msra.mxu0 0.0
    %780 = vmatprep.subr.mxu0 0.0
    %781 = vmatpush2.msra.mxu0 0.0
    %782 = vmatprep.subr.mxu0 0.0
    %783 = vmatpush2.msra.mxu0 0.0
    %784 = vmatprep.subr.mxu0 0.0
    %785 = vmatpush2.msra.mxu0 0.0
    %786 = vmatprep.subr.mxu0 0.0
    %787 = vmatpush2.msra.mxu0 0.0
    %788 = vmatprep.mubr.f32.mxu0 0.0
    %789 = vmatmul.mubr.f32.gmra.mxu0 %v700
    %v790 = vpop.f32.mrf.mxu0
    %v791 = vadd.f32 %v722, %v790
    %v792 = vpop.f32.mrf.mxu0
    %793 = vdwg.mxu0
    %794 = vst [vmem:[#allocation11] sm:$0x3] %v791
    // Predicated region
    $region58: #{tpu_custom_call.1} parent=1 // pred_check
      _
    $region59: #{tpu_custom_call.1} parent=1 // pred_check_branch
      %796 = sbr.rel (0) target = $region61
    $region60: #{tpu_custom_call.1} parent=1 // pred_region
      %s798 = ssub.s32 32, 32
      %799 = vsyncadd [#allocation4], %s798
      %s801 = sshll.u32 [#allocation11], 4
      %s802 = int_to_ptr.vmem [resolvable:$true] %s801
      %804 = dma.vmem_to_hbm [thread:$0]  %s802, 32, %s9, [#allocation4]
    $region61: #{tpu_custom_call.1} parent=1 // pred_fallthru
      _
    // Predicated region
    $region62: #{tpu_custom_call.1} parent=1 // pred_check
      _
    $region63: #{tpu_custom_call.1} parent=1 // pred_check_branch
      %806 = sbr.rel (0) target = $region65
    $region64: #{tpu_custom_call.1} parent=1 // pred_region
      %807 = dma.done [#allocation4], 32
    $region65: #{tpu_custom_call.1} parent=1 // pred_fallthru
      _
    %808 = vsyncpa [#allocation3], 1
    %809 = vsyncpa [#allocation6], 1
    %810 = vsyncpa [#allocation9], 1
    %811 = vsyncpa [#allocation4], 1

// kernel: tpu_custom_call.1
$region0: #{tpu_custom_call.1}
  #allocation0 [shape = 'u32[]', space=smem, size = 0x4, offset = 0x4, fixed_abs, tag = 'smem constant byte address 0x4 - core index']
  #allocation1 [shape = 'u32[144,128]{1,0:T(1,128)}', space=vmem, size = 0x12000, scoped, tag = 'internal scratch']
  %s0 = inlined_call_operand.hbm [shape: f32[2,16], index: 0, kind: input, shape index: {}]
  %s1 = inlined_call_operand.hbm [shape: f32[16,256], index: 1, kind: input, shape index: {}]
  %s2 = inlined_call_operand.vmem [shape: f32[1,256], index: 2, kind: input, shape index: {}]
  %s3 = inlined_call_operand.hbm [shape: f32[256,512], index: 3, kind: input, shape index: {}]
  %s4 = inlined_call_operand.vmem [shape: f32[1,512], index: 4, kind: input, shape index: {}]
  %s5 = inlined_call_operand.hbm [shape: f32[512,128], index: 5, kind: input, shape index: {}]
  %s6 = inlined_call_operand.vmem [shape: f32[1,128], index: 6, kind: input, shape index: {}]
  %s7 = inlined_call_operand.hbm [shape: f32[128,128], index: 7, kind: input, shape index: {}]
  %s8 = inlined_call_operand.vmem [shape: f32[1,128], index: 8, kind: input, shape index: {}]
  %s9 = inlined_call_operand.hbm [shape: f32[2,128], index: 9, kind: output, shape index: {}]
  %s10 = sld [smem:[#allocation0]]
  $region66: #{tpu_custom_call.1} parent=0
    _
  %s12 = ssub.s32 1, %s10
  %s13 = scalar_select 0, %s12, %s10
  $region1: #{tpu_custom_call.1} parent=0
    #allocation2 [shape = 'u8[1024]{0}', space=vmem, size = 0x400, scoped, tag = 'input window, operand 0, single buffered']
    #allocation3 [shape = 's32[1]{0}', space=sflag, size = 0x4, scoped, tag = 'scoped memory for tpu_custom_call.1']
    #allocation4 [shape = 's32[1]{0}', space=sflag, size = 0x4, scoped, tag = 'scoped memory for tpu_custom_call.1']
    #allocation5 [shape = 'u8[16384]{0}', space=vmem, size = 0x4000, scoped, tag = 'input window, operand 1, single buffered']
    #allocation6 [shape = 's32[1]{0}', space=sflag, size = 0x4, scoped, tag = 'scoped memory for tpu_custom_call.1']
    #allocation7 [shape = 'u8[524288]{0}', space=vmem, size = 0x80000, scoped, tag = 'input window, operand 3, single buffered']
    #allocation8 [shape = 'u8[262144]{0}', space=vmem, size = 0x40000, scoped, tag = 'input window, operand 5, single buffered']
    #allocation9 [shape = 's32[1]{0}', space=sflag, size = 0x4, scoped, tag = 'scoped memory for tpu_custom_call.1']
    #allocation10 [shape = 'u8[65536]{0}', space=vmem, size = 0x10000, scoped, tag = 'input window, operand 7, single buffered']
    #allocation11 [shape = 'u8[1024]{0}', space=vmem, size = 0x400, scoped, tag = 'output window, operand 0, single buffered']
    %14 = vsyncpa [#allocation3], 0
    %15 = vsyncpa [#allocation6], 0
    %16 = vsyncpa [#allocation9], 0
    %17 = vsyncpa [#allocation4], 0
    // Predicated region
    $region2: #{tpu_custom_call.1} parent=1 // pred_check
      _
    $region3: #{tpu_custom_call.1} parent=1 // pred_check_branch
      %19 = sbr.rel (0) target = $region5
    $region4: #{tpu_custom_call.1} parent=1 // pred_region
      %s21 = ssub.s32 32, 32
      %22 = vsyncadd [#allocation3], %s21
      %s24 = sshll.u32 [#allocation2], 4
      %s25 = int_to_ptr.vmem [resolvable:$true] %s24
      %27 = dma.hbm_to_vmem [thread:$0]  %s0, 32, %s25, [#allocation3]
    $region5: #{tpu_custom_call.1} parent=1 // pred_fallthru
      _
    // Predicated region
    $region6: #{tpu_custom_call.1} parent=1 // pred_check
      _
    $region7: #{tpu_custom_call.1} parent=1 // pred_check_branch
      %29 = sbr.rel (0) target = $region9
    $region8: #{tpu_custom_call.1} parent=1 // pred_region
      %s31 = ssub.s32 512, 512
      %32 = vsyncadd [#allocation6], %s31
      %s33 = sshll.u32 [#allocation5], 4
      %s34 = int_to_ptr.vmem [resolvable:$true] %s33
      %39 = dma.hbm_to_vmem [thread:$0]  %s1, 512, %s34, [#allocation6], 256, 256, 16
    $region9: #{tpu_custom_call.1} parent=1 // pred_fallthru
      _
    // Predicated region
    $region10: #{tpu_custom_call.1} parent=1 // pred_check
      _
    $region11: #{tpu_custom_call.1} parent=1 // pred_check_branch
      %41 = sbr.rel (0) target = $region13
    $region12: #{tpu_custom_call.1} parent=1 // pred_region
      _
    $region13: #{tpu_custom_call.1} parent=1 // pred_fallthru
      _
    // Predicated region
    $region14: #{tpu_custom_call.1} parent=1 // pred_check
      _
    $region15: #{tpu_custom_call.1} parent=1 // pred_check_branch
      %43 = sbr.rel (0) target = $region17
    $region16: #{tpu_custom_call.1} parent=1 // pred_region
      %s45 = ssub.s32 16384, 16384
      %46 = vsyncadd [#allocation6], %s45
      %s47 = sshll.u32 [#allocation7], 4
      %s48 = int_to_ptr.vmem [resolvable:$true] %s47
      %53 = dma.hbm_to_vmem [thread:$0]  %s3, 16384, %s48, [#allocation6], 512, 512, 32
    $region17: #{tpu_custom_call.1} parent=1 // pred_fallthru
      _
    // Predicated region
    $region18: #{tpu_custom_call.1} parent=1 // pred_check
      _
    $region19: #{tpu_custom_call.1} parent=1 // pred_check_branch
      %55 = sbr.rel (0) target = $region21
    $region20: #{tpu_custom_call.1} parent=1 // pred_region
      _
    $region21: #{tpu_custom_call.1} parent=1 // pred_fallthru
      _
    // Predicated region
    $region22: #{tpu_custom_call.1} parent=1 // pred_check
      _
    $region23: #{tpu_custom_call.1} parent=1 // pred_check_branch
      %57 = sbr.rel (0) target = $region25
    $region24: #{tpu_custom_call.1} parent=1 // pred_region
      %s59 = ssub.s32 8192, 8192
      %60 = vsyncadd [#allocation9], %s59
      %s61 = sshll.u32 [#allocation8], 4
      %s62 = int_to_ptr.vmem [resolvable:$true] %s61
      %67 = dma.hbm_to_vmem [thread:$0]  %s5, 8192, %s62, [#allocation9], 128, 128, 8
    $region25: #{tpu_custom_call.1} parent=1 // pred_fallthru
      _
    // Predicated region
    $region26: #{tpu_custom_call.1} parent=1 // pred_check
      _
    $region27: #{tpu_custom_call.1} parent=1 // pred_check_branch
      %69 = sbr.rel (0) target = $region29
    $region28: #{tpu_custom_call.1} parent=1 // pred_region
      _
    $region29: #{tpu_custom_call.1} parent=1 // pred_fallthru
      _
    // Predicated region
    $region30: #{tpu_custom_call.1} parent=1 // pred_check
      _
    $region31: #{tpu_custom_call.1} parent=1 // pred_check_branch
      %71 = sbr.rel (0) target = $region33
    $region32: #{tpu_custom_call.1} parent=1 // pred_region
      %s73 = ssub.s32 2048, 2048
      %74 = vsyncadd [#allocation9], %s73
      %s75 = sshll.u32 [#allocation10], 4
      %s76 = int_to_ptr.vmem [resolvable:$true] %s75
      %81 = dma.hbm_to_vmem [thread:$0]  %s7, 2048, %s76, [#allocation9], 128, 128, 8
    $region33: #{tpu_custom_call.1} parent=1 // pred_fallthru
      _
    // Predicated region
    $region34: #{tpu_custom_call.1} parent=1 // pred_check
      _
    $region35: #{tpu_custom_call.1} parent=1 // pred_check_branch
      %83 = sbr.rel (0) target = $region37
    $region36: #{tpu_custom_call.1} parent=1 // pred_region
      _
    $region37: #{tpu_custom_call.1} parent=1 // pred_fallthru
      _
    // Predicated region
    $region38: #{tpu_custom_call.1} parent=1 // pred_check
      _
    $region39: #{tpu_custom_call.1} parent=1 // pred_check_branch
      %85 = sbr.rel (0) target = $region41
    $region40: #{tpu_custom_call.1} parent=1 // pred_region
      %86 = dma.done [#allocation3], 32
    $region41: #{tpu_custom_call.1} parent=1 // pred_fallthru
      _
    // Predicated region
    $region42: #{tpu_custom_call.1} parent=1 // pred_check
      _
    $region43: #{tpu_custom_call.1} parent=1 // pred_check_branch
      %88 = sbr.rel (0) target = $region45
    $region44: #{tpu_custom_call.1} parent=1 // pred_region
      %89 = dma.done [#allocation6], 512
    $region45: #{tpu_custom_call.1} parent=1 // pred_fallthru
      _
    // Predicated region
    $region46: #{tpu_custom_call.1} parent=1 // pred_check
      _
    $region47: #{tpu_custom_call.1} parent=1 // pred_check_branch
      %91 = sbr.rel (0) target = $region49
    $region48: #{tpu_custom_call.1} parent=1 // pred_region
      %92 = dma.done [#allocation6], 16384
    $region49: #{tpu_custom_call.1} parent=1 // pred_fallthru
      _
    // Predicated region
    $region50: #{tpu_custom_call.1} parent=1 // pred_check
      _
    $region51: #{tpu_custom_call.1} parent=1 // pred_check_branch
      %94 = sbr.rel (0) target = $region53
    $region52: #{tpu_custom_call.1} parent=1 // pred_region
      %95 = dma.done [#allocation9], 8192
    $region53: #{tpu_custom_call.1} parent=1 // pred_fallthru
      _
    // Predicated region
    $region54: #{tpu_custom_call.1} parent=1 // pred_check
      _
    $region55: #{tpu_custom_call.1} parent=1 // pred_check_branch
      %97 = sbr.rel (0) target = $region57
    $region56: #{tpu_custom_call.1} parent=1 // pred_region
      %98 = dma.done [#allocation9], 2048
    $region57: #{tpu_custom_call.1} parent=1 // pred_fallthru
      _
    %v99 = vld [vmem:[#allocation2] sm:$0x3]
    %v100 = vld [vmem:[#allocation5] sm:$0xff]
    %v101 = vld [vmem:[#allocation5 + $0x8] sm:$0xff]
    %v102 = vld [vmem:[#allocation5 + $0x10] sm:$0xff]
    %v103 = vld [vmem:[#allocation5 + $0x18] sm:$0xff]
    %v104 = vld [vmem:[%s2] sm:$0x3]
    %v106 = vlaneseq
    %v107 = vshrl.u32 %v106, 7
    %v108 = vsub.s32 0, %v107
    %v109 = vrot.slane %v104, %v108
    %v110 = vlaneseq
    %v111 = vshrl.u32 %v110, 7
    %v112 = vsub.s32 1, %v111
    %v113 = vrot.slane %v104, %v112
    %vm116 = vcmask 130048
    %v118 = vsel %vm116, %v99, 0
    %120 = vmatprep.subr.mxu0 0.0
    %121 = vmatpush1.msra.mxu0 0.0
    %122 = vmatprep.subr.mxu0 0.0
    %123 = vmatpush1.msra.mxu0 0.0
    %124 = vmatprep.subr.mxu0 0.0
    %125 = vmatpush1.msra.mxu0 0.0
    %126 = vmatprep.subr.mxu0 0.0
    %127 = vmatpush1.msra.mxu0 0.0
    %128 = vmatprep.subr.mxu0 0.0
    %129 = vmatpush1.msra.mxu0 0.0
    %130 = vmatprep.subr.mxu0 0.0
    %131 = vmatpush1.msra.mxu0 0.0
    %132 = vmatprep.subr.mxu0 0.0
    %133 = vmatpush1.msra.mxu0 0.0
    %134 = vmatprep.subr.mxu0 0.0
    %135 = vmatpush1.msra.mxu0 0.0
    %136 = vmatprep.subr.mxu0 0.0
    %137 = vmatpush1.msra.mxu0 0.0
    %138 = vmatprep.subr.mxu0 0.0
    %139 = vmatpush1.msra.mxu0 0.0
    %140 = vmatprep.subr.mxu0 0.0
    %141 = vmatpush1.msra.mxu0 0.0
    %142 = vmatprep.subr.mxu0 0.0
    %143 = vmatpush1.msra.mxu0 0.0
    %144 = vmatprep.subr.mxu0 0.0
    %145 = vmatpush1.msra.mxu0 0.0
    %146 = vmatprep.subr.mxu0 0.0
    %147 = vmatpush1.msra.mxu0 0.0
    %148 = vmatprep.subr.mxu0 %v103
    %149 = vmatpush1.msra.mxu0 %v102
    %150 = vmatprep.subr.mxu0 %v101
    %151 = vmatpush1.msra.mxu0 %v100
    %152 = vmatprep.subr.mxu0 0.0
    %153 = vmatpush2.msra.mxu0 0.0
    %154 = vmatprep.subr.mxu0 0.0
    %155 = vmatpush2.msra.mxu0 0.0
    %156 = vmatprep.subr.mxu0 0.0
    %157 = vmatpush2.msra.mxu0 0.0
    %158 = vmatprep.subr.mxu0 0.0
    %159 = vmatpush2.msra.mxu0 0.0
    %160 = vmatprep.subr.mxu0 0.0
    %161 = vmatpush2.msra.mxu0 0.0
    %162 = vmatprep.subr.mxu0 0.0
    %163 = vmatpush2.msra.mxu0 0.0
    %164 = vmatprep.subr.mxu0 0.0
    %165 = vmatpush2.msra.mxu0 0.0
    %166 = vmatprep.subr.mxu0 0.0
    %167 = vmatpush2.msra.mxu0 0.0
    %168 = vmatprep.subr.mxu0 0.0
    %169 = vmatpush2.msra.mxu0 0.0
    %170 = vmatprep.subr.mxu0 0.0
    %171 = vmatpush2.msra.mxu0 0.0
    %172 = vmatprep.subr.mxu0 0.0
    %173 = vmatpush2.msra.mxu0 0.0
    %174 = vmatprep.subr.mxu0 0.0
    %175 = vmatpush2.msra.mxu0 0.0
    %176 = vmatprep.subr.mxu0 0.0
    %177 = vmatpush2.msra.mxu0 0.0
    %178 = vmatprep.subr.mxu0 0.0
    %179 = vmatpush2.msra.mxu0 0.0
    %180 = vmatprep.subr.mxu0 0.0
    %181 = vmatpush2.msra.mxu0 0.0
    %182 = vmatprep.subr.mxu0 0.0
    %183 = vmatpush2.msra.mxu0 0.0
    %184 = vmatprep.mubr.f32.mxu0 0.0
    %185 = vmatmul.mubr.f32.gmra.mxu0 %v118
    %v186 = vpop.f32.mrf.mxu0
    %v187 = vadd.f32 %v109, %v186
    %v188 = vpop.f32.mrf.mxu0
    %v189 = vadd.f32 %v113, %v188
    %190 = vdwg.mxu0
    %v191 = vmax.f32 %v187, 0.0
    %v192 = vmax.f32 %v189, 0.0
    %v193 = vld [vmem:[#allocation7] sm:$0xff]
    %v194 = vld [vmem:[#allocation7 + $0x8] sm:$0xff]
    %v195 = vld [vmem:[#allocation7 + $0x10] sm:$0xff]
    %v196 = vld [vmem:[#allocation7 + $0x18] sm:$0xff]
    %v197 = vld [vmem:[#allocation7 + $0x20] sm:$0xff]
    %v198 = vld [vmem:[#allocation7 + $0x28] sm:$0xff]
    %v199 = vld [vmem:[#allocation7 + $0x30] sm:$0xff]
    %v200 = vld [vmem:[#allocation7 + $0x38] sm:$0xff]
    %v201 = vld [vmem:[#allocation7 + $0x40] sm:$0xff]
    %v202 = vld [vmem:[#allocation7 + $0x48] sm:$0xff]
    %v203 = vld [vmem:[#allocation7 + $0x50] sm:$0xff]
    %v204 = vld [vmem:[#allocation7 + $0x58] sm:$0xff]
    %v205 = vld [vmem:[#allocation7 + $0x60] sm:$0xff]
    %v206 = vld [vmem:[#allocation7 + $0x68] sm:$0xff]
    %v207 = vld [vmem:[#allocation7 + $0x70] sm:$0xff]
    %v208 = vld [vmem:[#allocation7 + $0x78] sm:$0xff]
    %v209 = vld [vmem:[#allocation7 + $0x80] sm:$0xff]
    %v210 = vld [vmem:[#allocation7 + $0x88] sm:$0xff]
    %v211 = vld [vmem:[#allocation7 + $0x90] sm:$0xff]
    %v212 = vld [vmem:[#allocation7 + $0x98] sm:$0xff]
    %v213 = vld [vmem:[#allocation7 + $0xa0] sm:$0xff]
    %v214 = vld [vmem:[#allocation7 + $0xa8] sm:$0xff]
    %v215 = vld [vmem:[#allocation7 + $0xb0] sm:$0xff]
    %v216 = vld [vmem:[#allocation7 + $0xb8] sm:$0xff]
    %v217 = vld [vmem:[#allocation7 + $0xc0] sm:$0xff]
    %v218 = vld [vmem:[#allocation7 + $0xc8] sm:$0xff]
    %v219 = vld [vmem:[#allocation7 + $0xd0] sm:$0xff]
    %v220 = vld [vmem:[#allocation7 + $0xd8] sm:$0xff]
    %v221 = vld [vmem:[#allocation7 + $0xe0] sm:$0xff]
    %v222 = vld [vmem:[#allocation7 + $0xe8] sm:$0xff]
    %v223 = vld [vmem:[#allocation7 + $0xf0] sm:$0xff]
    %v224 = vld [vmem:[#allocation7 + $0xf8] sm:$0xff]
    %v225 = vld [vmem:[#allocation7 + $0x100] sm:$0xff]
    %v226 = vld [vmem:[#allocation7 + $0x108] sm:$0xff]
    %v227 = vld [vmem:[#allocation7 + $0x110] sm:$0xff]
    %v228 = vld [vmem:[#allocation7 + $0x118] sm:$0xff]
    %v229 = vld [vmem:[#allocation7 + $0x120] sm:$0xff]
    %v230 = vld [vmem:[#allocation7 + $0x128] sm:$0xff]
    %v231 = vld [vmem:[#allocation7 + $0x130] sm:$0xff]
    %v232 = vld [vmem:[#allocation7 + $0x138] sm:$0xff]
    %v233 = vld [vmem:[#allocation7 + $0x140] sm:$0xff]
    %v234 = vld [vmem:[#allocation7 + $0x148] sm:$0xff]
    %v235 = vld [vmem:[#allocation7 + $0x150] sm:$0xff]
    %v236 = vld [vmem:[#allocation7 + $0x158] sm:$0xff]
    %v237 = vld [vmem:[#allocation7 + $0x160] sm:$0xff]
    %v238 = vld [vmem:[#allocation7 + $0x168] sm:$0xff]
    %v239 = vld [vmem:[#allocation7 + $0x170] sm:$0xff]
    %v240 = vld [vmem:[#allocation7 + $0x178] sm:$0xff]
    %v241 = vld [vmem:[#allocation7 + $0x180] sm:$0xff]
    %v242 = vld [vmem:[#allocation7 + $0x188] sm:$0xff]
    %v243 = vld [vmem:[#allocation7 + $0x190] sm:$0xff]
    %v244 = vld [vmem:[#allocation7 + $0x198] sm:$0xff]
    %v245 = vld [vmem:[#allocation7 + $0x1a0] sm:$0xff]
    %v246 = vld [vmem:[#allocation7 + $0x1a8] sm:$0xff]
    %v247 = vld [vmem:[#allocation7 + $0x1b0] sm:$0xff]
    %v248 = vld [vmem:[#allocation7 + $0x1b8] sm:$0xff]
    %v249 = vld [vmem:[#allocation7 + $0x1c0] sm:$0xff]
    %v250 = vld [vmem:[#allocation7 + $0x1c8] sm:$0xff]
    %v251 = vld [vmem:[#allocation7 + $0x1d0] sm:$0xff]
    %v252 = vld [vmem:[#allocation7 + $0x1d8] sm:$0xff]
    %v253 = vld [vmem:[#allocation7 + $0x1e0] sm:$0xff]
    %v254 = vld [vmem:[#allocation7 + $0x1e8] sm:$0xff]
    %v255 = vld [vmem:[#allocation7 + $0x1f0] sm:$0xff]
    %v256 = vld [vmem:[#allocation7 + $0x1f8] sm:$0xff]
    %v257 = vld [vmem:[#allocation7 + $0x200] sm:$0xff]
    %v258 = vld [vmem:[#allocation7 + $0x208] sm:$0xff]
    %v259 = vld [vmem:[#allocation7 + $0x210] sm:$0xff]
    %v260 = vld [vmem:[#allocation7 + $0x218] sm:$0xff]
    %v261 = vld [vmem:[#allocation7 + $0x220] sm:$0xff]
    %v262 = vld [vmem:[#allocation7 + $0x228] sm:$0xff]
    %v263 = vld [vmem:[#allocation7 + $0x230] sm:$0xff]
    %v264 = vld [vmem:[#allocation7 + $0x238] sm:$0xff]
    %v265 = vld [vmem:[#allocation7 + $0x240] sm:$0xff]
    %v266 = vld [vmem:[#allocation7 + $0x248] sm:$0xff]
    %v267 = vld [vmem:[#allocation7 + $0x250] sm:$0xff]
    %v268 = vld [vmem:[#allocation7 + $0x258] sm:$0xff]
    %v269 = vld [vmem:[#allocation7 + $0x260] sm:$0xff]
    %v270 = vld [vmem:[#allocation7 + $0x268] sm:$0xff]
    %v271 = vld [vmem:[#allocation7 + $0x270] sm:$0xff]
    %v272 = vld [vmem:[#allocation7 + $0x278] sm:$0xff]
    %v273 = vld [vmem:[#allocation7 + $0x280] sm:$0xff]
    %v274 = vld [vmem:[#allocation7 + $0x288] sm:$0xff]
    %v275 = vld [vmem:[#allocation7 + $0x290] sm:$0xff]
    %v276 = vld [vmem:[#allocation7 + $0x298] sm:$0xff]
    %v277 = vld [vmem:[#allocation7 + $0x2a0] sm:$0xff]
    %v278 = vld [vmem:[#allocation7 + $0x2a8] sm:$0xff]
    %v279 = vld [vmem:[#allocation7 + $0x2b0] sm:$0xff]
    %v280 = vld [vmem:[#allocation7 + $0x2b8] sm:$0xff]
    %v281 = vld [vmem:[#allocation7 + $0x2c0] sm:$0xff]
    %v282 = vld [vmem:[#allocation7 + $0x2c8] sm:$0xff]
    %v283 = vld [vmem:[#allocation7 + $0x2d0] sm:$0xff]
    %v284 = vld [vmem:[#allocation7 + $0x2d8] sm:$0xff]
    %v285 = vld [vmem:[#allocation7 + $0x2e0] sm:$0xff]
    %v286 = vld [vmem:[#allocation7 + $0x2e8] sm:$0xff]
    %v287 = vld [vmem:[#allocation7 + $0x2f0] sm:$0xff]
    %v288 = vld [vmem:[#allocation7 + $0x2f8] sm:$0xff]
    %v289 = vld [vmem:[#allocation7 + $0x300] sm:$0xff]
    %v290 = vld [vmem:[#allocation7 + $0x308] sm:$0xff]
    %v291 = vld [vmem:[#allocation7 + $0x310] sm:$0xff]
    %v292 = vld [vmem:[#allocation7 + $0x318] sm:$0xff]
    %v293 = vld [vmem:[#allocation7 + $0x320] sm:$0xff]
    %v294 = vld [vmem:[#allocation7 + $0x328] sm:$0xff]
    %v295 = vld [vmem:[#allocation7 + $0x330] sm:$0xff]
    %v296 = vld [vmem:[#allocation7 + $0x338] sm:$0xff]
    %v297 = vld [vmem:[#allocation7 + $0x340] sm:$0xff]
    %v298 = vld [vmem:[#allocation7 + $0x348] sm:$0xff]
    %v299 = vld [vmem:[#allocation7 + $0x350] sm:$0xff]
    %v300 = vld [vmem:[#allocation7 + $0x358] sm:$0xff]
    %v301 = vld [vmem:[#allocation7 + $0x360] sm:$0xff]
    %v302 = vld [vmem:[#allocation7 + $0x368] sm:$0xff]
    %v303 = vld [vmem:[#allocation7 + $0x370] sm:$0xff]
    %v304 = vld [vmem:[#allocation7 + $0x378] sm:$0xff]
    %v305 = vld [vmem:[#allocation7 + $0x380] sm:$0xff]
    %v306 = vld [vmem:[#allocation7 + $0x388] sm:$0xff]
    %v307 = vld [vmem:[#allocation7 + $0x390] sm:$0xff]
    %v308 = vld [vmem:[#allocation7 + $0x398] sm:$0xff]
    %v309 = vld [vmem:[#allocation7 + $0x3a0] sm:$0xff]
    %v310 = vld [vmem:[#allocation7 + $0x3a8] sm:$0xff]
    %v311 = vld [vmem:[#allocation7 + $0x3b0] sm:$0xff]
    %v312 = vld [vmem:[#allocation7 + $0x3b8] sm:$0xff]
    %v313 = vld [vmem:[#allocation7 + $0x3c0] sm:$0xff]
    %v314 = vld [vmem:[#allocation7 + $0x3c8] sm:$0xff]
    %v315 = vld [vmem:[#allocation7 + $0x3d0] sm:$0xff]
    %v316 = vld [vmem:[#allocation7 + $0x3d8] sm:$0xff]
    %v317 = vld [vmem:[#allocation7 + $0x3e0] sm:$0xff]
    %v318 = vld [vmem:[#allocation7 + $0x3e8] sm:$0xff]
    %v319 = vld [vmem:[#allocation7 + $0x3f0] sm:$0xff]
    %v320 = vld [vmem:[#allocation7 + $0x3f8] sm:$0xff]
    %v321 = vld [vmem:[%s4] sm:$0xf]
    %v323 = vlaneseq
    %v324 = vshrl.u32 %v323, 7
    %v325 = vsub.s32 0, %v324
    %v326 = vrot.slane %v321, %v325
    %v327 = vlaneseq
    %v328 = vshrl.u32 %v327, 7
    %v329 = vsub.s32 1, %v328
    %v330 = vrot.slane %v321, %v329
    %v331 = vlaneseq
    %v332 = vshrl.u32 %v331, 7
    %v333 = vsub.s32 2, %v332
    %v334 = vrot.slane %v321, %v333
    %v335 = vlaneseq
    %v336 = vshrl.u32 %v335, 7
    %v337 = vsub.s32 3, %v336
    %v338 = vrot.slane %v321, %v337
    %343 = vmatprep.subr.mxu0 %v254
    %344 = vmatpush1.msra.mxu0 %v253
    %345 = vmatprep.subr.mxu0 %v250
    %346 = vmatpush1.msra.mxu0 %v249
    %347 = vmatprep.subr.mxu0 %v246
    %348 = vmatpush1.msra.mxu0 %v245
    %349 = vmatprep.subr.mxu0 %v242
    %350 = vmatpush1.msra.mxu0 %v241
    %351 = vmatprep.subr.mxu0 %v238
    %352 = vmatpush1.msra.mxu0 %v237
    %353 = vmatprep.subr.mxu0 %v234
    %354 = vmatpush1.msra.mxu0 %v233
    %355 = vmatprep.subr.mxu0 %v230
    %356 = vmatpush1.msra.mxu0 %v229
    %357 = vmatprep.subr.mxu0 %v226
    %358 = vmatpush1.msra.mxu0 %v225
    %359 = vmatprep.subr.mxu0 %v222
    %360 = vmatpush1.msra.mxu0 %v221
    %361 = vmatprep.subr.mxu0 %v218
    %362 = vmatpush1.msra.mxu0 %v217
    %363 = vmatprep.subr.mxu0 %v214
    %364 = vmatpush1.msra.mxu0 %v213
    %365 = vmatprep.subr.mxu0 %v210
    %366 = vmatpush1.msra.mxu0 %v209
    %367 = vmatprep.subr.mxu0 %v206
    %368 = vmatpush1.msra.mxu0 %v205
    %369 = vmatprep.subr.mxu0 %v202
    %370 = vmatpush1.msra.mxu0 %v201
    %371 = vmatprep.subr.mxu0 %v198
    %372 = vmatpush1.msra.mxu0 %v197
    %373 = vmatprep.subr.mxu0 %v194
    %374 = vmatpush1.msra.mxu0 %v193
    %375 = vmatprep.subr.mxu0 %v318
    %376 = vmatpush2.msra.mxu0 %v317
    %377 = vmatprep.subr.mxu0 %v314
    %378 = vmatpush2.msra.mxu0 %v313
    %379 = vmatprep.subr.mxu0 %v310
    %380 = vmatpush2.msra.mxu0 %v309
    %381 = vmatprep.subr.mxu0 %v306
    %382 = vmatpush2.msra.mxu0 %v305
    %383 = vmatprep.subr.mxu0 %v302
    %384 = vmatpush2.msra.mxu0 %v301
    %385 = vmatprep.subr.mxu0 %v298
    %386 = vmatpush2.msra.mxu0 %v297
    %387 = vmatprep.subr.mxu0 %v294
    %388 = vmatpush2.msra.mxu0 %v293
    %389 = vmatprep.subr.mxu0 %v290
    %390 = vmatpush2.msra.mxu0 %v289
    %391 = vmatprep.subr.mxu0 %v286
    %392 = vmatpush2.msra.mxu0 %v285
    %393 = vmatprep.subr.mxu0 %v282
    %394 = vmatpush2.msra.mxu0 %v281
    %395 = vmatprep.subr.mxu0 %v278
    %396 = vmatpush2.msra.mxu0 %v277
    %397 = vmatprep.subr.mxu0 %v274
    %398 = vmatpush2.msra.mxu0 %v273
    %399 = vmatprep.subr.mxu0 %v270
    %400 = vmatpush2.msra.mxu0 %v269
    %401 = vmatprep.subr.mxu0 %v266
    %402 = vmatpush2.msra.mxu0 %v265
    %403 = vmatprep.subr.mxu0 %v262
    %404 = vmatpush2.msra.mxu0 %v261
    %405 = vmatprep.subr.mxu0 %v258
    %406 = vmatpush2.msra.mxu0 %v257
    %407 = vmatprep.mubr.f32.mxu0 %v192
    %408 = vmatmul.mubr.f32.gmra.mxu0 %v191
    %v409 = vpop.f32.mrf.mxu0
    %v410 = vadd.f32 %v326, %v409
    %v411 = vpop.f32.mrf.mxu0
    %v412 = vadd.f32 %v330, %v411
    %413 = vdwg.mxu0
    %414 = vmatprep.subr.mxu0 %v256
    %415 = vmatpush1.msra.mxu0 %v255
    %416 = vmatprep.subr.mxu0 %v252
    %417 = vmatpush1.msra.mxu0 %v251
    %418 = vmatprep.subr.mxu0 %v248
    %419 = vmatpush1.msra.mxu0 %v247
    %420 = vmatprep.subr.mxu0 %v244
    %421 = vmatpush1.msra.mxu0 %v243
    %422 = vmatprep.subr.mxu0 %v240
    %423 = vmatpush1.msra.mxu0 %v239
    %424 = vmatprep.subr.mxu0 %v236
    %425 = vmatpush1.msra.mxu0 %v235
    %426 = vmatprep.subr.mxu0 %v232
    %427 = vmatpush1.msra.mxu0 %v231
    %428 = vmatprep.subr.mxu0 %v228
    %429 = vmatpush1.msra.mxu0 %v227
    %430 = vmatprep.subr.mxu0 %v224
    %431 = vmatpush1.msra.mxu0 %v223
    %432 = vmatprep.subr.mxu0 %v220
    %433 = vmatpush1.msra.mxu0 %v219
    %434 = vmatprep.subr.mxu0 %v216
    %435 = vmatpush1.msra.mxu0 %v215
    %436 = vmatprep.subr.mxu0 %v212
    %437 = vmatpush1.msra.mxu0 %v211
    %438 = vmatprep.subr.mxu0 %v208
    %439 = vmatpush1.msra.mxu0 %v207
    %440 = vmatprep.subr.mxu0 %v204
    %441 = vmatpush1.msra.mxu0 %v203
    %442 = vmatprep.subr.mxu0 %v200
    %443 = vmatpush1.msra.mxu0 %v199
    %444 = vmatprep.subr.mxu0 %v196
    %445 = vmatpush1.msra.mxu0 %v195
    %446 = vmatprep.subr.mxu0 %v320
    %447 = vmatpush2.msra.mxu0 %v319
    %448 = vmatprep.subr.mxu0 %v316
    %449 = vmatpush2.msra.mxu0 %v315
    %450 = vmatprep.subr.mxu0 %v312
    %451 = vmatpush2.msra.mxu0 %v311
    %452 = vmatprep.subr.mxu0 %v308
    %453 = vmatpush2.msra.mxu0 %v307
    %454 = vmatprep.subr.mxu0 %v304
    %455 = vmatpush2.msra.mxu0 %v303
    %456 = vmatprep.subr.mxu0 %v300
    %457 = vmatpush2.msra.mxu0 %v299
    %458 = vmatprep.subr.mxu0 %v296
    %459 = vmatpush2.msra.mxu0 %v295
    %460 = vmatprep.subr.mxu0 %v292
    %461 = vmatpush2.msra.mxu0 %v291
    %462 = vmatprep.subr.mxu0 %v288
    %463 = vmatpush2.msra.mxu0 %v287
    %464 = vmatprep.subr.mxu0 %v284
    %465 = vmatpush2.msra.mxu0 %v283
    %466 = vmatprep.subr.mxu0 %v280
    %467 = vmatpush2.msra.mxu0 %v279
    %468 = vmatprep.subr.mxu0 %v276
    %469 = vmatpush2.msra.mxu0 %v275
    %470 = vmatprep.subr.mxu0 %v272
    %471 = vmatpush2.msra.mxu0 %v271
    %472 = vmatprep.subr.mxu0 %v268
    %473 = vmatpush2.msra.mxu0 %v267
    %474 = vmatprep.subr.mxu0 %v264
    %475 = vmatpush2.msra.mxu0 %v263
    %476 = vmatprep.subr.mxu0 %v260
    %477 = vmatpush2.msra.mxu0 %v259
    %478 = vmatprep.mubr.f32.mxu0 %v192
    %479 = vmatmul.mubr.f32.gmra.mxu0 %v191
    %v480 = vpop.f32.mrf.mxu0
    %v481 = vadd.f32 %v334, %v480
    %v482 = vpop.f32.mrf.mxu0
    %v483 = vadd.f32 %v338, %v482
    %484 = vdwg.mxu0
    %v485 = vmax.f32 %v410, 0.0
    %v486 = vmax.f32 %v412, 0.0
    %v487 = vmax.f32 %v481, 0.0
    %v488 = vmax.f32 %v483, 0.0
    %v489 = vld [vmem:[#allocation8] sm:$0xff]
    %v490 = vld [vmem:[#allocation8 + $0x8] sm:$0xff]
    %v491 = vld [vmem:[#allocation8 + $0x10] sm:$0xff]
    %v492 = vld [vmem:[#allocation8 + $0x18] sm:$0xff]
    %v493 = vld [vmem:[#allocation8 + $0x20] sm:$0xff]
    %v494 = vld [vmem:[#allocation8 + $0x28] sm:$0xff]
    %v495 = vld [vmem:[#allocation8 + $0x30] sm:$0xff]
    %v496 = vld [vmem:[#allocation8 + $0x38] sm:$0xff]
    %v497 = vld [vmem:[#allocation8 + $0x40] sm:$0xff]
    %v498 = vld [vmem:[#allocation8 + $0x48] sm:$0xff]
    %v499 = vld [vmem:[#allocation8 + $0x50] sm:$0xff]
    %v500 = vld [vmem:[#allocation8 + $0x58] sm:$0xff]
    %v501 = vld [vmem:[#allocation8 + $0x60] sm:$0xff]
    %v502 = vld [vmem:[#allocation8 + $0x68] sm:$0xff]
    %v503 = vld [vmem:[#allocation8 + $0x70] sm:$0xff]
    %v504 = vld [vmem:[#allocation8 + $0x78] sm:$0xff]
    %v505 = vld [vmem:[#allocation8 + $0x80] sm:$0xff]
    %v506 = vld [vmem:[#allocation8 + $0x88] sm:$0xff]
    %v507 = vld [vmem:[#allocation8 + $0x90] sm:$0xff]
    %v508 = vld [vmem:[#allocation8 + $0x98] sm:$0xff]
    %v509 = vld [vmem:[#allocation8 + $0xa0] sm:$0xff]
    %v510 = vld [vmem:[#allocation8 + $0xa8] sm:$0xff]
    %v511 = vld [vmem:[#allocation8 + $0xb0] sm:$0xff]
    %v512 = vld [vmem:[#allocation8 + $0xb8] sm:$0xff]
    %v513 = vld [vmem:[#allocation8 + $0xc0] sm:$0xff]
    %v514 = vld [vmem:[#allocation8 + $0xc8] sm:$0xff]
    %v515 = vld [vmem:[#allocation8 + $0xd0] sm:$0xff]
    %v516 = vld [vmem:[#allocation8 + $0xd8] sm:$0xff]
    %v517 = vld [vmem:[#allocation8 + $0xe0] sm:$0xff]
    %v518 = vld [vmem:[#allocation8 + $0xe8] sm:$0xff]
    %v519 = vld [vmem:[#allocation8 + $0xf0] sm:$0xff]
    %v520 = vld [vmem:[#allocation8 + $0xf8] sm:$0xff]
    %v521 = vld [vmem:[#allocation8 + $0x100] sm:$0xff]
    %v522 = vld [vmem:[#allocation8 + $0x108] sm:$0xff]
    %v523 = vld [vmem:[#allocation8 + $0x110] sm:$0xff]
    %v524 = vld [vmem:[#allocation8 + $0x118] sm:$0xff]
    %v525 = vld [vmem:[#allocation8 + $0x120] sm:$0xff]
    %v526 = vld [vmem:[#allocation8 + $0x128] sm:$0xff]
    %v527 = vld [vmem:[#allocation8 + $0x130] sm:$0xff]
    %v528 = vld [vmem:[#allocation8 + $0x138] sm:$0xff]
    %v529 = vld [vmem:[#allocation8 + $0x140] sm:$0xff]
    %v530 = vld [vmem:[#allocation8 + $0x148] sm:$0xff]
    %v531 = vld [vmem:[#allocation8 + $0x150] sm:$0xff]
    %v532 = vld [vmem:[#allocation8 + $0x158] sm:$0xff]
    %v533 = vld [vmem:[#allocation8 + $0x160] sm:$0xff]
    %v534 = vld [vmem:[#allocation8 + $0x168] sm:$0xff]
    %v535 = vld [vmem:[#allocation8 + $0x170] sm:$0xff]
    %v536 = vld [vmem:[#allocation8 + $0x178] sm:$0xff]
    %v537 = vld [vmem:[#allocation8 + $0x180] sm:$0xff]
    %v538 = vld [vmem:[#allocation8 + $0x188] sm:$0xff]
    %v539 = vld [vmem:[#allocation8 + $0x190] sm:$0xff]
    %v540 = vld [vmem:[#allocation8 + $0x198] sm:$0xff]
    %v541 = vld [vmem:[#allocation8 + $0x1a0] sm:$0xff]
    %v542 = vld [vmem:[#allocation8 + $0x1a8] sm:$0xff]
    %v543 = vld [vmem:[#allocation8 + $0x1b0] sm:$0xff]
    %v544 = vld [vmem:[#allocation8 + $0x1b8] sm:$0xff]
    %v545 = vld [vmem:[#allocation8 + $0x1c0] sm:$0xff]
    %v546 = vld [vmem:[#allocation8 + $0x1c8] sm:$0xff]
    %v547 = vld [vmem:[#allocation8 + $0x1d0] sm:$0xff]
    %v548 = vld [vmem:[#allocation8 + $0x1d8] sm:$0xff]
    %v549 = vld [vmem:[#allocation8 + $0x1e0] sm:$0xff]
    %v550 = vld [vmem:[#allocation8 + $0x1e8] sm:$0xff]
    %v551 = vld [vmem:[#allocation8 + $0x1f0] sm:$0xff]
    %v552 = vld [vmem:[#allocation8 + $0x1f8] sm:$0xff]
    %v553 = vld [vmem:[%s6] sm:$0x1]
    %v555 = vlaneseq
    %v556 = vshrl.u32 %v555, 7
    %v557 = vsub.s32 0, %v556
    %v558 = vrot.slane %v553, %v557
    %560 = vmatprep.subr.mxu0 0.0
    %561 = vmatpush1.msra.mxu0 %v504
    %562 = vmatprep.subr.mxu0 0.0
    %563 = vmatpush1.msra.mxu0 %v503
    %564 = vmatprep.subr.mxu0 0.0
    %565 = vmatpush1.msra.mxu0 %v502
    %566 = vmatprep.subr.mxu0 0.0
    %567 = vmatpush1.msra.mxu0 %v501
    %568 = vmatprep.subr.mxu0 0.0
    %569 = vmatpush1.msra.mxu0 %v500
    %570 = vmatprep.subr.mxu0 0.0
    %571 = vmatpush1.msra.mxu0 %v499
    %572 = vmatprep.subr.mxu0 0.0
    %573 = vmatpush1.msra.mxu0 %v498
    %574 = vmatprep.subr.mxu0 0.0
    %575 = vmatpush1.msra.mxu0 %v497
    %576 = vmatprep.subr.mxu0 0.0
    %577 = vmatpush1.msra.mxu0 %v496
    %578 = vmatprep.subr.mxu0 0.0
    %579 = vmatpush1.msra.mxu0 %v495
    %580 = vmatprep.subr.mxu0 0.0
    %581 = vmatpush1.msra.mxu0 %v494
    %582 = vmatprep.subr.mxu0 0.0
    %583 = vmatpush1.msra.mxu0 %v493
    %584 = vmatprep.subr.mxu0 0.0
    %585 = vmatpush1.msra.mxu0 %v492
    %586 = vmatprep.subr.mxu0 0.0
    %587 = vmatpush1.msra.mxu0 %v491
    %588 = vmatprep.subr.mxu0 0.0
    %589 = vmatpush1.msra.mxu0 %v490
    %590 = vmatprep.subr.mxu0 0.0
    %591 = vmatpush1.msra.mxu0 %v489
    %592 = vmatprep.subr.mxu0 0.0
    %593 = vmatpush2.msra.mxu0 %v520
    %594 = vmatprep.subr.mxu0 0.0
    %595 = vmatpush2.msra.mxu0 %v519
    %596 = vmatprep.subr.mxu0 0.0
    %597 = vmatpush2.msra.mxu0 %v518
    %598 = vmatprep.subr.mxu0 0.0
    %599 = vmatpush2.msra.mxu0 %v517
    %600 = vmatprep.subr.mxu0 0.0
    %601 = vmatpush2.msra.mxu0 %v516
    %602 = vmatprep.subr.mxu0 0.0
    %603 = vmatpush2.msra.mxu0 %v515
    %604 = vmatprep.subr.mxu0 0.0
    %605 = vmatpush2.msra.mxu0 %v514
    %606 = vmatprep.subr.mxu0 0.0
    %607 = vmatpush2.msra.mxu0 %v513
    %608 = vmatprep.subr.mxu0 0.0
    %609 = vmatpush2.msra.mxu0 %v512
    %610 = vmatprep.subr.mxu0 0.0
    %611 = vmatpush2.msra.mxu0 %v511
    %612 = vmatprep.subr.mxu0 0.0
    %613 = vmatpush2.msra.mxu0 %v510
    %614 = vmatprep.subr.mxu0 0.0
    %615 = vmatpush2.msra.mxu0 %v509
    %616 = vmatprep.subr.mxu0 0.0
    %617 = vmatpush2.msra.mxu0 %v508
    %618 = vmatprep.subr.mxu0 0.0
    %619 = vmatpush2.msra.mxu0 %v507
    %620 = vmatprep.subr.mxu0 0.0
    %621 = vmatpush2.msra.mxu0 %v506
    %622 = vmatprep.subr.mxu0 0.0
    %623 = vmatpush2.msra.mxu0 %v505
    %624 = vmatprep.mubr.f32.mxu0 %v486
    %625 = vmatmul.mubr.f32.gmra.mxu0 %v485
    %v626 = vpop.f32.mrf.mxu0
    %v627 = vadd.f32 %v558, %v626
    %v628 = vpop.f32.mrf.mxu0
    %629 = vdwg.mxu0
    %630 = vmatprep.subr.mxu0 0.0
    %631 = vmatpush1.msra.mxu0 %v536
    %632 = vmatprep.subr.mxu0 0.0
    %633 = vmatpush1.msra.mxu0 %v535
    %634 = vmatprep.subr.mxu0 0.0
    %635 = vmatpush1.msra.mxu0 %v534
    %636 = vmatprep.subr.mxu0 0.0
    %637 = vmatpush1.msra.mxu0 %v533
    %638 = vmatprep.subr.mxu0 0.0
    %639 = vmatpush1.msra.mxu0 %v532
    %640 = vmatprep.subr.mxu0 0.0
    %641 = vmatpush1.msra.mxu0 %v531
    %642 = vmatprep.subr.mxu0 0.0
    %643 = vmatpush1.msra.mxu0 %v530
    %644 = vmatprep.subr.mxu0 0.0
    %645 = vmatpush1.msra.mxu0 %v529
    %646 = vmatprep.subr.mxu0 0.0
    %647 = vmatpush1.msra.mxu0 %v528
    %648 = vmatprep.subr.mxu0 0.0
    %649 = vmatpush1.msra.mxu0 %v527
    %650 = vmatprep.subr.mxu0 0.0
    %651 = vmatpush1.msra.mxu0 %v526
    %652 = vmatprep.subr.mxu0 0.0
    %653 = vmatpush1.msra.mxu0 %v525
    %654 = vmatprep.subr.mxu0 0.0
    %655 = vmatpush1.msra.mxu0 %v524
    %656 = vmatprep.subr.mxu0 0.0
    %657 = vmatpush1.msra.mxu0 %v523
    %658 = vmatprep.subr.mxu0 0.0
    %659 = vmatpush1.msra.mxu0 %v522
    %660 = vmatprep.subr.mxu0 0.0
    %661 = vmatpush1.msra.mxu0 %v521
    %662 = vmatprep.subr.mxu0 0.0
    %663 = vmatpush2.msra.mxu0 %v552
    %664 = vmatprep.subr.mxu0 0.0
    %665 = vmatpush2.msra.mxu0 %v551
    %666 = vmatprep.subr.mxu0 0.0
    %667 = vmatpush2.msra.mxu0 %v550
    %668 = vmatprep.subr.mxu0 0.0
    %669 = vmatpush2.msra.mxu0 %v549
    %670 = vmatprep.subr.mxu0 0.0
    %671 = vmatpush2.msra.mxu0 %v548
    %672 = vmatprep.subr.mxu0 0.0
    %673 = vmatpush2.msra.mxu0 %v547
    %674 = vmatprep.subr.mxu0 0.0
    %675 = vmatpush2.msra.mxu0 %v546
    %676 = vmatprep.subr.mxu0 0.0
    %677 = vmatpush2.msra.mxu0 %v545
    %678 = vmatprep.subr.mxu0 0.0
    %679 = vmatpush2.msra.mxu0 %v544
    %680 = vmatprep.subr.mxu0 0.0
    %681 = vmatpush2.msra.mxu0 %v543
    %682 = vmatprep.subr.mxu0 0.0
    %683 = vmatpush2.msra.mxu0 %v542
    %684 = vmatprep.subr.mxu0 0.0
    %685 = vmatpush2.msra.mxu0 %v541
    %686 = vmatprep.subr.mxu0 0.0
    %687 = vmatpush2.msra.mxu0 %v540
    %688 = vmatprep.subr.mxu0 0.0
    %689 = vmatpush2.msra.mxu0 %v539
    %690 = vmatprep.subr.mxu0 0.0
    %691 = vmatpush2.msra.mxu0 %v538
    %692 = vmatprep.subr.mxu0 0.0
    %693 = vmatpush2.msra.mxu0 %v537
    %694 = vmatprep.mubr.f32.mxu0 %v488
    %695 = vmatmul.mubr.f32.gmra.mxu0 %v487
    %v696 = vpop.f32.mrf.mxu0
    %v697 = vadd.f32 %v627, %v696
    %v698 = vpop.f32.mrf.mxu0
    %699 = vdwg.mxu0
    %v700 = vmax.f32 %v697, 0.0
    %v701 = vld [vmem:[#allocation10] sm:$0xff]
    %v702 = vld [vmem:[#allocation10 + $0x8] sm:$0xff]
    %v703 = vld [vmem:[#allocation10 + $0x10] sm:$0xff]
    %v704 = vld [vmem:[#allocation10 + $0x18] sm:$0xff]
    %v705 = vld [vmem:[#allocation10 + $0x20] sm:$0xff]
    %v706 = vld [vmem:[#allocation10 + $0x28] sm:$0xff]
    %v707 = vld [vmem:[#allocation10 + $0x30] sm:$0xff]
    %v708 = vld [vmem:[#allocation10 + $0x38] sm:$0xff]
    %v709 = vld [vmem:[#allocation10 + $0x40] sm:$0xff]
    %v710 = vld [vmem:[#allocation10 + $0x48] sm:$0xff]
    %v711 = vld [vmem:[#allocation10 + $0x50] sm:$0xff]
    %v712 = vld [vmem:[#allocation10 + $0x58] sm:$0xff]
    %v713 = vld [vmem:[#allocation10 + $0x60] sm:$0xff]
    %v714 = vld [vmem:[#allocation10 + $0x68] sm:$0xff]
    %v715 = vld [vmem:[#allocation10 + $0x70] sm:$0xff]
    %v716 = vld [vmem:[#allocation10 + $0x78] sm:$0xff]
    %v717 = vld [vmem:[%s8] sm:$0x1]
    %v719 = vlaneseq
    %v720 = vshrl.u32 %v719, 7
    %v721 = vsub.s32 0, %v720
    %v722 = vrot.slane %v717, %v721
    %724 = vmatprep.subr.mxu0 0.0
    %725 = vmatpush1.msra.mxu0 %v716
    %726 = vmatprep.subr.mxu0 0.0
    %727 = vmatpush1.msra.mxu0 %v715
    %728 = vmatprep.subr.mxu0 0.0
    %729 = vmatpush1.msra.mxu0 %v714
    %730 = vmatprep.subr.mxu0 0.0
    %731 = vmatpush1.msra.mxu0 %v713
    %732 = vmatprep.subr.mxu0 0.0
    %733 = vmatpush1.msra.mxu0 %v712
    %734 = vmatprep.subr.mxu0 0.0
    %735 = vmatpush1.msra.mxu0 %v711
    %736 = vmatprep.subr.mxu0 0.0
    %737 = vmatpush1.msra.mxu0 %v710
    %738 = vmatprep.subr.mxu0 0.0
    %739 = vmatpush1.msra.mxu0 %v709
    %740 = vmatprep.subr.mxu0 0.0
    %741 = vmatpush1.msra.mxu0 %v708
    %742 = vmatprep.subr.mxu0 0.0
    %743 = vmatpush1.msra.mxu0 %v707
    %744 = vmatprep.subr.mxu0 0.0
    %745 = vmatpush1.msra.mxu0 %v706
    %746 = vmatprep.subr.mxu0 0.0
    %747 = vmatpush1.msra.mxu0 %v705
    %748 = vmatprep.subr.mxu0 0.0
    %749 = vmatpush1.msra.mxu0 %v704
    %750 = vmatprep.subr.mxu0 0.0
    %751 = vmatpush1.msra.mxu0 %v703
    %752 = vmatprep.subr.mxu0 0.0
    %753 = vmatpush1.msra.mxu0 %v702
    %754 = vmatprep.subr.mxu0 0.0
    %755 = vmatpush1.msra.mxu0 %v701
    %756 = vmatprep.subr.mxu0 0.0
    %757 = vmatpush2.msra.mxu0 0.0
    %758 = vmatprep.subr.mxu0 0.0
    %759 = vmatpush2.msra.mxu0 0.0
    %760 = vmatprep.subr.mxu0 0.0
    %761 = vmatpush2.msra.mxu0 0.0
    %762 = vmatprep.subr.mxu0 0.0
    %763 = vmatpush2.msra.mxu0 0.0
    %764 = vmatprep.subr.mxu0 0.0
    %765 = vmatpush2.msra.mxu0 0.0
    %766 = vmatprep.subr.mxu0 0.0
    %767 = vmatpush2.msra.mxu0 0.0
    %768 = vmatprep.subr.mxu0 0.0
    %769 = vmatpush2.msra.mxu0 0.0
    %770 = vmatprep.subr.mxu0 0.0
    %771 = vmatpush2.msra.mxu0 0.0
    %772 = vmatprep.subr.mxu0 0.0
    %773 = vmatpush2.msra.mxu0 0.0
    %774 = vmatprep.subr.mxu0 0.0
    %775 = vmatpush2.msra.mxu0 0.0
    %776 = vmatprep.subr.mxu0 0.0
    %777 = vmatpush2.msra.mxu0 0.0
    %778 = vmatprep.subr.mxu0 0.0
    %779 = vmatpush2.msra.mxu0 0.0
    %780 = vmatprep.subr.mxu0 0.0
    %781 = vmatpush2.msra.mxu0 0.0
    %782 = vmatprep.subr.mxu0 0.0
    %783 = vmatpush2.msra.mxu0 0.0
    %784 = vmatprep.subr.mxu0 0.0
    %785 = vmatpush2.msra.mxu0 0.0
    %786 = vmatprep.subr.mxu0 0.0
    %787 = vmatpush2.msra.mxu0 0.0
    %788 = vmatprep.mubr.f32.mxu0 0.0
    %789 = vmatmul.mubr.f32.gmra.mxu0 %v700
    %v790 = vpop.f32.mrf.mxu0
    %v791 = vadd.f32 %v722, %v790
    %v792 = vpop.f32.mrf.mxu0
    %793 = vdwg.mxu0
    %794 = vst [vmem:[#allocation11] sm:$0x3] %v791
    // Predicated region
    $region58: #{tpu_custom_call.1} parent=1 // pred_check
      _
    $region59: #{tpu_custom_call.1} parent=1 // pred_check_branch
      %796 = sbr.rel (0) target = $region61
    $region60: #{tpu_custom_call.1} parent=1 // pred_region
      %s798 = ssub.s32 32, 32
      %799 = vsyncadd [#allocation4], %s798
      %s801 = sshll.u32 [#allocation11], 4
      %s802 = int_to_ptr.vmem [resolvable:$true] %s801
      %804 = dma.vmem_to_hbm [thread:$0]  %s802, 32, %s9, [#allocation4]
    $region61: #{tpu_custom_call.1} parent=1 // pred_fallthru
      _
    // Predicated region
    $region62: #{tpu_custom_call.1} parent=1 // pred_check
      _
    $region63: #{tpu_custom_call.1} parent=1 // pred_check_branch
      %806 = sbr.rel (0) target = $region65
    $region64: #{tpu_custom_call.1} parent=1 // pred_region
      %807 = dma.done [#allocation4], 32
    $region65: #{tpu_custom_call.1} parent=1 // pred_fallthru
      _
    %808 = vsyncpa [#allocation3], 1
    %809 = vsyncpa [#allocation6], 1
    %810 = vsyncpa [#allocation9], 1
    %811 = vsyncpa [#allocation4], 1

</llo_original>
